<compile_context>
chip_gen: v6e
topology: v6e:2x2x1
jax: 0.10.0
libtpu: 0.0.40
codegen_flags: <defaults>
</compile_context>

<pallas_src>
import functools

import jax
import jax.numpy as jnp
from jax.experimental import pallas as pl
from jax.experimental.pallas import tpu as pltpu


def attention_kernel(x_ref, wq_ref, wkv_ref, wp_ref, bp_ref, o_ref,
                     k_s, v_s, o_s, *, num_heads, scale, tq):
    # x_ref : (N, C)    full token block for this batch element (batch squeezed)
    # wq_ref: (C, C)    query projection
    # wkv_ref:(C, 2C)   fused key|value projection
    # wp_ref: (C, C)    output projection
    # bp_ref: (1, C)    output projection bias
    # o_ref : (TQ, C)   output block for this query tile
    # k_s,v_s:(N, C)    VMEM scratch (input dtype) holding K / V for the batch
    # o_s   : (TQ, C)   VMEM scratch (input dtype), pre-projection attention output
    qi = pl.program_id(1)
    N, C = x_ref.shape
    hd = C // num_heads

    # --- K / V for the whole batch element: one fused (N,C)x(C,2C) matmul, done
    #     once per batch element (first query tile) and kept resident in scratch
    #     across the "arbitrary" query-tile axis.
    @pl.when(qi == 0)
    def _():
        kv = jnp.dot(x_ref[...], wkv_ref[...],
                     preferred_element_type=jnp.float32)               # (N, 2C) f32
        k_s[...] = kv[:, :C].astype(k_s.dtype)
        v_s[...] = kv[:, C:].astype(v_s.dtype)

    # --- Q for the current query tile; scale folded into q, not the NxN scores.
    q_start = pl.multiple_of(qi * tq, tq)
    x_q = x_ref[pl.ds(q_start, tq), :]                                  # (TQ, C)
    q = jnp.dot(x_q, wq_ref[...], preferred_element_type=jnp.float32) * scale
    q = q.astype(x_ref.dtype)        # MXU operand dtype = input dtype (bf16 in prod)
    k = k_s[...]
    v = v_s[...]

    # --- Per-head attention. H is small and static -> unrolled Python loop.
    # TODO(synk): for head_dim < 128 these column slices are not lane-dense; a
    # batched-heads (H, TQ, hd) dot_general or padding head_dim to 128 would remove
    # the per-head relayout cost.
    for h in range(num_heads):
        sl = slice(h * hd, (h + 1) * hd)
        q_h, k_h, v_h = q[:, sl], k[:, sl], v[:, sl]                    # (TQ/N, hd)
        s = jnp.dot(q_h, k_h.T, preferred_element_type=jnp.float32)     # (TQ, N) f32
        s = s - jnp.max(s, axis=-1, keepdims=True)                      # stable softmax
        p = jnp.exp(s)
        denom = jnp.sum(p, axis=-1, keepdims=True)                      # (TQ, 1)
        o_h = jnp.dot(p.astype(v_h.dtype), v_h,
                      preferred_element_type=jnp.float32)               # (TQ, hd)
        # Deferred normalization: O(TQ*hd) multiplies, reciprocal on the EUP slot.
        o_h = o_h * pl.reciprocal(denom, approx=True)
        o_s[:, sl] = o_h.astype(o_s.dtype)

    # --- Single full-width output projection (contraction dim = C) + bias.
    out = jnp.dot(o_s[...], wp_ref[...], preferred_element_type=jnp.float32)
    o_ref[...] = (out + bp_ref[...]).astype(o_ref.dtype)


def _pick_query_tile(n):
    # 256-aligned tiles fill the 2x256x256 MXU on v6e/v7x; 128 is natural on v5e.
    for t in (256, 128):
        if n % t == 0:
            return t
    return n  # small N: single tile


def attention_forward(x, wq, wkv, wp, bp, *, num_heads, tq=None):
    B, N, C = x.shape
    assert C % num_heads == 0
    scale = (C // num_heads) ** -0.5
    if tq is None:
        tq = _pick_query_tile(N)
    assert N % tq == 0, "pad N in the wrapper for ragged token counts"
    nq = N // tq

    kern = functools.partial(attention_kernel, num_heads=num_heads,
                             scale=scale, tq=tq)
    return pl.pallas_call(
        kern,
        out_shape=jax.ShapeDtypeStruct((B, N, C), x.dtype),
        grid=(B, nq),
        in_specs=[
            # x: full-token block per batch element; index map is constant across
            # the query axis so it is DMA'd once per batch. Batch dim squeezed.
            pl.BlockSpec((None, N, C), lambda b, qi: (b, 0, 0)),
            # Constant weights: index maps never change -> fetched once.
            # TODO(synk): on v7x (64 MiB VMEM) consider pipeline_mode=pl.Buffered(1)
            # and/or bf16 weights to halve the resident weight footprint.
            pl.BlockSpec((C, C), lambda b, qi: (0, 0)),        # Wq
            pl.BlockSpec((C, 2 * C), lambda b, qi: (0, 0)),    # Wkv (fused K|V)
            pl.BlockSpec((C, C), lambda b, qi: (0, 0)),        # Wproj
            pl.BlockSpec((1, C), lambda b, qi: (0, 0)),        # bproj
        ],
        out_specs=pl.BlockSpec((None, tq, C), lambda b, qi: (b, qi, 0)),
        scratch_shapes=[
            pltpu.VMEM((N, C), x.dtype),    # K (resident per batch element)
            pltpu.VMEM((N, C), x.dtype),    # V
            pltpu.VMEM((tq, C), x.dtype),   # pre-projection attention output
        ],
        compiler_params=pltpu.CompilerParams(
            # Batch axis feeds megacore / v7x's two TensorCores; the query-tile
            # axis must be "arbitrary" because the K/V scratch is reused across it.
            dimension_semantics=("parallel", "arbitrary")),
    )(x, wq, wkv, wp, bp)


def reference_attention(x, w_qkv, wp, bp, *, num_heads):
    # Pure-JAX mirror of the PyTorch forward, for correctness checking.
    B, N, C = x.shape
    hd = C // num_heads
    scale = hd ** -0.5
    qkv = (x @ w_qkv).reshape(B, N, 3, num_heads, hd).transpose(2, 0, 3, 1, 4)
    q, k, v = qkv[0], qkv[1], qkv[2]
    attn = jnp.einsum("bhqd,bhkd->bhqk", q, k) * scale
    attn = jax.nn.softmax(attn, axis=-1)
    out = jnp.einsum("bhqk,bhkd->bhqd", attn, v)
    out = out.transpose(0, 2, 1, 3).reshape(B, N, C)
    return out @ wp + bp[0]


if __name__ == "__main__":
    B, N, C, H = 2, 8, 32, 8    # tokens=8, dim=32, heads=8 -> head_dim=4

    key = jax.random.PRNGKey(0)
    kx, kqkv, kp, kb = jax.random.split(key, 4)

    x = jax.random.normal(kx, (B, N, C), dtype=jnp.float32)
    # Module shapes: qkv = Linear(C, 3C, bias=False), proj = Linear(C, C) with bias.
    # Weights stored (in_features, out_features) so the kernel computes y = x @ W.
    w_qkv = jax.random.normal(kqkv, (C, 3 * C), dtype=jnp.float32) * 0.1
    wp = jax.random.normal(kp, (C, C), dtype=jnp.float32) * 0.1
    bp = jax.random.normal(kb, (1, C), dtype=jnp.float32) * 0.1

    wq, wkv = w_qkv[:, :C], w_qkv[:, C:]   # split for the fused-KV kernel layout

    out = attention_forward(x, wq, wkv, wp, bp, num_heads=H)
    out = jax.block_until_ready(out)

    ref = reference_attention(x, w_qkv, wp, bp, num_heads=H)
    assert out.shape == (B, N, C)
    max_err = float(jnp.max(jnp.abs(out - ref)))
    # Tolerance loosened slightly vs f32-exact because of the approximate
    # EUP reciprocal used for the softmax normalization.
    assert jnp.allclose(out, ref, atol=2e-3, rtol=2e-3), f"mismatch vs reference: {max_err}"

    print("KERNEL_OK")
</pallas_src>

<mosaic_0001>
module attributes {stable_mosaic.version = 11 : i64} {
  func.func @attention_kernel(%arg0: i32, %arg1: i32, %arg2: memref<1x8x32xf32, #tpu.memory_space<vmem>>, %arg3: memref<32x32xf32, #tpu.memory_space<vmem>>, %arg4: memref<32x64xf32, #tpu.memory_space<vmem>>, %arg5: memref<32x32xf32, #tpu.memory_space<vmem>>, %arg6: memref<1x32xf32, #tpu.memory_space<vmem>>, %arg7: memref<1x8x32xf32, #tpu.memory_space<vmem>>, %arg8: memref<8x32xf32, #tpu.memory_space<vmem>>, %arg9: memref<8x32xf32, #tpu.memory_space<vmem>>, %arg10: memref<8x32xf32, #tpu.memory_space<vmem>>) attributes {dimension_semantics = [#tpu.dimension_semantics<parallel>, #tpu.dimension_semantics<arbitrary>], iteration_bounds = array<i64: 2, 1>, scalar_prefetch = 0 : i64, scratch_operands = 3 : i64, tpu.core_type = #tpu.core_type<tc>, window_params = [{transform_indices = @transform_0, window_bounds = array<i64: 1, 8, 32>}, {pipeline_mode = #tpu.pipeline_mode<synchronous>, transform_indices = @transform_1, window_bounds = array<i64: 32, 32>}, {pipeline_mode = #tpu.pipeline_mode<synchronous>, transform_indices = @transform_2, window_bounds = array<i64: 32, 64>}, {pipeline_mode = #tpu.pipeline_mode<synchronous>, transform_indices = @transform_3, window_bounds = array<i64: 32, 32>}, {pipeline_mode = #tpu.pipeline_mode<synchronous>, transform_indices = @transform_4, window_bounds = array<i64: 1, 32>}, {transform_indices = @transform_5, window_bounds = array<i64: 1, 8, 32>}]} {
    %c0_i32 = arith.constant 0 : i32
    %0 = arith.cmpi eq, %arg1, %c0_i32 : i32
    %1 = arith.extui %0 : i1 to i32
    %c0_i32_0 = arith.constant 0 : i32
    %2 = arith.cmpi ne, %1, %c0_i32_0 : i32
    scf.if %2 {
      %c0_60 = arith.constant 0 : index
      %c0_61 = arith.constant 0 : index
      %c0_62 = arith.constant 0 : index
      %159 = vector.load %arg2[%c0_60, %c0_61, %c0_62] : memref<1x8x32xf32, #tpu.memory_space<vmem>>, vector<1x8x32xf32>
      %160 = vector.shape_cast %159 : vector<1x8x32xf32> to vector<8x32xf32>
      %c0_63 = arith.constant 0 : index
      %c0_64 = arith.constant 0 : index
      %161 = vector.load %arg4[%c0_63, %c0_64] : memref<32x64xf32, #tpu.memory_space<vmem>>, vector<32x64xf32>
      %cst_65 = arith.constant dense<0.000000e+00> : vector<8x64xf32>
      %162 = tpu.matmul %160, %161, %cst_65 {dimension_numbers = #tpu.dot_dimension_numbers<[1], [0], [0], [1], [0, 0, 1, 1], [], []>} : vector<8x32xf32>, vector<32x64xf32>, vector<8x64xf32> -> vector<8x64xf32>
      %163 = vector.extract_strided_slice %162 {offsets = [0, 0], sizes = [8, 32], strides = [1, 1]} : vector<8x64xf32> to vector<8x32xf32>
      %c0_66 = arith.constant 0 : index
      %c0_67 = arith.constant 0 : index
      %164 = vector.load %arg8[%c0_66, %c0_67] : memref<8x32xf32, #tpu.memory_space<vmem>>, vector<8x32xf32>
      tpu.vector_store %arg8[%c0_66, %c0_67], %163 {strides = array<i32>} : memref<8x32xf32, #tpu.memory_space<vmem>>, vector<8x32xf32>,
      %165 = vector.extract_strided_slice %162 {offsets = [0, 32], sizes = [8, 32], strides = [1, 1]} : vector<8x64xf32> to vector<8x32xf32>
      %c0_68 = arith.constant 0 : index
      %c0_69 = arith.constant 0 : index
      %166 = vector.load %arg9[%c0_68, %c0_69] : memref<8x32xf32, #tpu.memory_space<vmem>>, vector<8x32xf32>
      tpu.vector_store %arg9[%c0_68, %c0_69], %165 {strides = array<i32>} : memref<8x32xf32, #tpu.memory_space<vmem>>, vector<8x32xf32>,
    } else {
    }
    %c8_i32 = arith.constant 8 : i32
    %3 = arith.muli %arg1, %c8_i32 : i32
    %4 = tpu.assume_multiple %3, 8 : i32
    %c0 = arith.constant 0 : index
    %5 = arith.index_cast %4 : i32 to index
    %c0_1 = arith.constant 0 : index
    %6 = vector.load %arg2[%c0, %5, %c0_1] : memref<1x8x32xf32, #tpu.memory_space<vmem>>, vector<1x8x32xf32>
    %7 = vector.shape_cast %6 : vector<1x8x32xf32> to vector<8x32xf32>
    %c0_2 = arith.constant 0 : index
    %c0_3 = arith.constant 0 : index
    %8 = vector.load %arg3[%c0_2, %c0_3] : memref<32x32xf32, #tpu.memory_space<vmem>>, vector<32x32xf32>
    %cst = arith.constant dense<0.000000e+00> : vector<8x32xf32>
    %9 = tpu.matmul %7, %8, %cst {dimension_numbers = #tpu.dot_dimension_numbers<[1], [0], [0], [1], [0, 0, 1, 1], [], []>} : vector<8x32xf32>, vector<32x32xf32>, vector<8x32xf32> -> vector<8x32xf32>
    %cst_4 = arith.constant 5.000000e-01 : f32
    %10 = vector.broadcast %cst_4 : f32 to vector<8x32xf32>
    %11 = arith.mulf %9, %10 : vector<8x32xf32>
    %c0_5 = arith.constant 0 : index
    %c0_6 = arith.constant 0 : index
    %12 = vector.load %arg8[%c0_5, %c0_6] : memref<8x32xf32, #tpu.memory_space<vmem>>, vector<8x32xf32>
    %c0_7 = arith.constant 0 : index
    %c0_8 = arith.constant 0 : index
    %13 = vector.load %arg9[%c0_7, %c0_8] : memref<8x32xf32, #tpu.memory_space<vmem>>, vector<8x32xf32>
    %14 = vector.extract_strided_slice %11 {offsets = [0, 0], sizes = [8, 4], strides = [1, 1]} : vector<8x32xf32> to vector<8x4xf32>
    %15 = vector.extract_strided_slice %12 {offsets = [0, 0], sizes = [8, 4], strides = [1, 1]} : vector<8x32xf32> to vector<8x4xf32>
    %16 = vector.extract_strided_slice %13 {offsets = [0, 0], sizes = [8, 4], strides = [1, 1]} : vector<8x32xf32> to vector<8x4xf32>
    %17 = tpu.transpose %15, [1, 0] : vector<8x4xf32> -> vector<4x8xf32>
    %cst_9 = arith.constant dense<0.000000e+00> : vector<8x8xf32>
    %18 = tpu.matmul %14, %17, %cst_9 {dimension_numbers = #tpu.dot_dimension_numbers<[1], [0], [0], [1], [0, 0, 1, 1], [], []>} : vector<8x4xf32>, vector<4x8xf32>, vector<8x8xf32> -> vector<8x8xf32>
    %cst_10 = arith.constant dense<0xFF800000> : vector<8xf32>
    %19 = vector.multi_reduction <maximumf>, %18, %cst_10 [1] : vector<8x8xf32> to vector<8xf32>
    %20 = vector.shape_cast %19 : vector<8xf32> to vector<8x1xf32>
    %21 = vector.broadcast %20 : vector<8x1xf32> to vector<8x8xf32>
    %22 = arith.subf %18, %21 : vector<8x8xf32>
    %23 = math.exp %22 : vector<8x8xf32>
    %cst_11 = arith.constant dense<0.000000e+00> : vector<8xf32>
    %24 = vector.multi_reduction <add>, %23, %cst_11 [1] : vector<8x8xf32> to vector<8xf32>
    %25 = vector.shape_cast %24 : vector<8xf32> to vector<8x1xf32>
    %cst_12 = arith.constant dense<0.000000e+00> : vector<8x4xf32>
    %26 = tpu.matmul %23, %16, %cst_12 {dimension_numbers = #tpu.dot_dimension_numbers<[1], [0], [0], [1], [0, 0, 1, 1], [], []>} : vector<8x8xf32>, vector<8x4xf32>, vector<8x4xf32> -> vector<8x4xf32>
    %27 = tpu.reciprocal %25 {approx = true} : vector<8x1xf32> -> vector<8x1xf32>
    %28 = vector.broadcast %27 : vector<8x1xf32> to vector<8x4xf32>
    %29 = arith.mulf %26, %28 : vector<8x4xf32>
    %c0_13 = arith.constant 0 : index
    %c0_14 = arith.constant 0 : index
    %30 = vector.load %arg10[%c0_13, %c0_14] : memref<8x32xf32, #tpu.memory_space<vmem>>, vector<8x4xf32>
    tpu.vector_store %arg10[%c0_13, %c0_14], %29 {strides = array<i32>} : memref<8x32xf32, #tpu.memory_space<vmem>>, vector<8x4xf32>,
    %31 = vector.extract_strided_slice %11 {offsets = [0, 4], sizes = [8, 4], strides = [1, 1]} : vector<8x32xf32> to vector<8x4xf32>
    %32 = vector.extract_strided_slice %12 {offsets = [0, 4], sizes = [8, 4], strides = [1, 1]} : vector<8x32xf32> to vector<8x4xf32>
    %33 = vector.extract_strided_slice %13 {offsets = [0, 4], sizes = [8, 4], strides = [1, 1]} : vector<8x32xf32> to vector<8x4xf32>
    %34 = tpu.transpose %32, [1, 0] : vector<8x4xf32> -> vector<4x8xf32>
    %cst_15 = arith.constant dense<0.000000e+00> : vector<8x8xf32>
    %35 = tpu.matmul %31, %34, %cst_15 {dimension_numbers = #tpu.dot_dimension_numbers<[1], [0], [0], [1], [0, 0, 1, 1], [], []>} : vector<8x4xf32>, vector<4x8xf32>, vector<8x8xf32> -> vector<8x8xf32>
    %cst_16 = arith.constant dense<0xFF800000> : vector<8xf32>
    %36 = vector.multi_reduction <maximumf>, %35, %cst_16 [1] : vector<8x8xf32> to vector<8xf32>
    %37 = vector.shape_cast %36 : vector<8xf32> to vector<8x1xf32>
    %38 = vector.broadcast %37 : vector<8x1xf32> to vector<8x8xf32>
    %39 = arith.subf %35, %38 : vector<8x8xf32>
    %40 = math.exp %39 : vector<8x8xf32>
    %cst_17 = arith.constant dense<0.000000e+00> : vector<8xf32>
    %41 = vector.multi_reduction <add>, %40, %cst_17 [1] : vector<8x8xf32> to vector<8xf32>
    %42 = vector.shape_cast %41 : vector<8xf32> to vector<8x1xf32>
    %cst_18 = arith.constant dense<0.000000e+00> : vector<8x4xf32>
    %43 = tpu.matmul %40, %33, %cst_18 {dimension_numbers = #tpu.dot_dimension_numbers<[1], [0], [0], [1], [0, 0, 1, 1], [], []>} : vector<8x8xf32>, vector<8x4xf32>, vector<8x4xf32> -> vector<8x4xf32>
    %44 = tpu.reciprocal %42 {approx = true} : vector<8x1xf32> -> vector<8x1xf32>
    %45 = vector.broadcast %44 : vector<8x1xf32> to vector<8x4xf32>
    %46 = arith.mulf %43, %45 : vector<8x4xf32>
    %c0_19 = arith.constant 0 : index
    %c4 = arith.constant 4 : index
    %47 = vector.load %arg10[%c0_19, %c4] : memref<8x32xf32, #tpu.memory_space<vmem>>, vector<8x4xf32>
    tpu.vector_store %arg10[%c0_19, %c4], %46 {strides = array<i32>} : memref<8x32xf32, #tpu.memory_space<vmem>>, vector<8x4xf32>,
    %48 = vector.extract_strided_slice %11 {offsets = [0, 8], sizes = [8, 4], strides = [1, 1]} : vector<8x32xf32> to vector<8x4xf32>
    %49 = vector.extract_strided_slice %12 {offsets = [0, 8], sizes = [8, 4], strides = [1, 1]} : vector<8x32xf32> to vector<8x4xf32>
    %50 = vector.extract_strided_slice %13 {offsets = [0, 8], sizes = [8, 4], strides = [1, 1]} : vector<8x32xf32> to vector<8x4xf32>
    %51 = tpu.transpose %49, [1, 0] : vector<8x4xf32> -> vector<4x8xf32>
    %cst_20 = arith.constant dense<0.000000e+00> : vector<8x8xf32>
    %52 = tpu.matmul %48, %51, %cst_20 {dimension_numbers = #tpu.dot_dimension_numbers<[1], [0], [0], [1], [0, 0, 1, 1], [], []>} : vector<8x4xf32>, vector<4x8xf32>, vector<8x8xf32> -> vector<8x8xf32>
    %cst_21 = arith.constant dense<0xFF800000> : vector<8xf32>
    %53 = vector.multi_reduction <maximumf>, %52, %cst_21 [1] : vector<8x8xf32> to vector<8xf32>
    %54 = vector.shape_cast %53 : vector<8xf32> to vector<8x1xf32>
    %55 = vector.broadcast %54 : vector<8x1xf32> to vector<8x8xf32>
    %56 = arith.subf %52, %55 : vector<8x8xf32>
    %57 = math.exp %56 : vector<8x8xf32>
    %cst_22 = arith.constant dense<0.000000e+00> : vector<8xf32>
    %58 = vector.multi_reduction <add>, %57, %cst_22 [1] : vector<8x8xf32> to vector<8xf32>
    %59 = vector.shape_cast %58 : vector<8xf32> to vector<8x1xf32>
    %cst_23 = arith.constant dense<0.000000e+00> : vector<8x4xf32>
    %60 = tpu.matmul %57, %50, %cst_23 {dimension_numbers = #tpu.dot_dimension_numbers<[1], [0], [0], [1], [0, 0, 1, 1], [], []>} : vector<8x8xf32>, vector<8x4xf32>, vector<8x4xf32> -> vector<8x4xf32>
    %61 = tpu.reciprocal %59 {approx = true} : vector<8x1xf32> -> vector<8x1xf32>
    %62 = vector.broadcast %61 : vector<8x1xf32> to vector<8x4xf32>
    %63 = arith.mulf %60, %62 : vector<8x4xf32>
    %c0_24 = arith.constant 0 : index
    %c8 = arith.constant 8 : index
    %64 = vector.load %arg10[%c0_24, %c8] : memref<8x32xf32, #tpu.memory_space<vmem>>, vector<8x4xf32>
    tpu.vector_store %arg10[%c0_24, %c8], %63 {strides = array<i32>} : memref<8x32xf32, #tpu.memory_space<vmem>>, vector<8x4xf32>,
    %65 = vector.extract_strided_slice %11 {offsets = [0, 12], sizes = [8, 4], strides = [1, 1]} : vector<8x32xf32> to vector<8x4xf32>
    %66 = vector.extract_strided_slice %12 {offsets = [0, 12], sizes = [8, 4], strides = [1, 1]} : vector<8x32xf32> to vector<8x4xf32>
    %67 = vector.extract_strided_slice %13 {offsets = [0, 12], sizes = [8, 4], strides = [1, 1]} : vector<8x32xf32> to vector<8x4xf32>
    %68 = tpu.transpose %66, [1, 0] : vector<8x4xf32> -> vector<4x8xf32>
    %cst_25 = arith.constant dense<0.000000e+00> : vector<8x8xf32>
    %69 = tpu.matmul %65, %68, %cst_25 {dimension_numbers = #tpu.dot_dimension_numbers<[1], [0], [0], [1], [0, 0, 1, 1], [], []>} : vector<8x4xf32>, vector<4x8xf32>, vector<8x8xf32> -> vector<8x8xf32>
    %cst_26 = arith.constant dense<0xFF800000> : vector<8xf32>
    %70 = vector.multi_reduction <maximumf>, %69, %cst_26 [1] : vector<8x8xf32> to vector<8xf32>
    %71 = vector.shape_cast %70 : vector<8xf32> to vector<8x1xf32>
    %72 = vector.broadcast %71 : vector<8x1xf32> to vector<8x8xf32>
    %73 = arith.subf %69, %72 : vector<8x8xf32>
    %74 = math.exp %73 : vector<8x8xf32>
    %cst_27 = arith.constant dense<0.000000e+00> : vector<8xf32>
    %75 = vector.multi_reduction <add>, %74, %cst_27 [1] : vector<8x8xf32> to vector<8xf32>
    %76 = vector.shape_cast %75 : vector<8xf32> to vector<8x1xf32>
    %cst_28 = arith.constant dense<0.000000e+00> : vector<8x4xf32>
    %77 = tpu.matmul %74, %67, %cst_28 {dimension_numbers = #tpu.dot_dimension_numbers<[1], [0], [0], [1], [0, 0, 1, 1], [], []>} : vector<8x8xf32>, vector<8x4xf32>, vector<8x4xf32> -> vector<8x4xf32>
    %78 = tpu.reciprocal %76 {approx = true} : vector<8x1xf32> -> vector<8x1xf32>
    %79 = vector.broadcast %78 : vector<8x1xf32> to vector<8x4xf32>
    %80 = arith.mulf %77, %79 : vector<8x4xf32>
    %c0_29 = arith.constant 0 : index
    %c12 = arith.constant 12 : index
    %81 = vector.load %arg10[%c0_29, %c12] : memref<8x32xf32, #tpu.memory_space<vmem>>, vector<8x4xf32>
    tpu.vector_store %arg10[%c0_29, %c12], %80 {strides = array<i32>} : memref<8x32xf32, #tpu.memory_space<vmem>>, vector<8x4xf32>,
    %82 = vector.extract_strided_slice %11 {offsets = [0, 16], sizes = [8, 4], strides = [1, 1]} : vector<8x32xf32> to vector<8x4xf32>
    %83 = vector.extract_strided_slice %12 {offsets = [0, 16], sizes = [8, 4], strides = [1, 1]} : vector<8x32xf32> to vector<8x4xf32>
    %84 = vector.extract_strided_slice %13 {offsets = [0, 16], sizes = [8, 4], strides = [1, 1]} : vector<8x32xf32> to vector<8x4xf32>
    %85 = tpu.transpose %83, [1, 0] : vector<8x4xf32> -> vector<4x8xf32>
    %cst_30 = arith.constant dense<0.000000e+00> : vector<8x8xf32>
    %86 = tpu.matmul %82, %85, %cst_30 {dimension_numbers = #tpu.dot_dimension_numbers<[1], [0], [0], [1], [0, 0, 1, 1], [], []>} : vector<8x4xf32>, vector<4x8xf32>, vector<8x8xf32> -> vector<8x8xf32>
    %cst_31 = arith.constant dense<0xFF800000> : vector<8xf32>
    %87 = vector.multi_reduction <maximumf>, %86, %cst_31 [1] : vector<8x8xf32> to vector<8xf32>
    %88 = vector.shape_cast %87 : vector<8xf32> to vector<8x1xf32>
    %89 = vector.broadcast %88 : vector<8x1xf32> to vector<8x8xf32>
    %90 = arith.subf %86, %89 : vector<8x8xf32>
    %91 = math.exp %90 : vector<8x8xf32>
    %cst_32 = arith.constant dense<0.000000e+00> : vector<8xf32>
    %92 = vector.multi_reduction <add>, %91, %cst_32 [1] : vector<8x8xf32> to vector<8xf32>
    %93 = vector.shape_cast %92 : vector<8xf32> to vector<8x1xf32>
    %cst_33 = arith.constant dense<0.000000e+00> : vector<8x4xf32>
    %94 = tpu.matmul %91, %84, %cst_33 {dimension_numbers = #tpu.dot_dimension_numbers<[1], [0], [0], [1], [0, 0, 1, 1], [], []>} : vector<8x8xf32>, vector<8x4xf32>, vector<8x4xf32> -> vector<8x4xf32>
    %95 = tpu.reciprocal %93 {approx = true} : vector<8x1xf32> -> vector<8x1xf32>
    %96 = vector.broadcast %95 : vector<8x1xf32> to vector<8x4xf32>
    %97 = arith.mulf %94, %96 : vector<8x4xf32>
    %c0_34 = arith.constant 0 : index
    %c16 = arith.constant 16 : index
    %98 = vector.load %arg10[%c0_34, %c16] : memref<8x32xf32, #tpu.memory_space<vmem>>, vector<8x4xf32>
    tpu.vector_store %arg10[%c0_34, %c16], %97 {strides = array<i32>} : memref<8x32xf32, #tpu.memory_space<vmem>>, vector<8x4xf32>,
    %99 = vector.extract_strided_slice %11 {offsets = [0, 20], sizes = [8, 4], strides = [1, 1]} : vector<8x32xf32> to vector<8x4xf32>
    %100 = vector.extract_strided_slice %12 {offsets = [0, 20], sizes = [8, 4], strides = [1, 1]} : vector<8x32xf32> to vector<8x4xf32>
    %101 = vector.extract_strided_slice %13 {offsets = [0, 20], sizes = [8, 4], strides = [1, 1]} : vector<8x32xf32> to vector<8x4xf32>
    %102 = tpu.transpose %100, [1, 0] : vector<8x4xf32> -> vector<4x8xf32>
    %cst_35 = arith.constant dense<0.000000e+00> : vector<8x8xf32>
    %103 = tpu.matmul %99, %102, %cst_35 {dimension_numbers = #tpu.dot_dimension_numbers<[1], [0], [0], [1], [0, 0, 1, 1], [], []>} : vector<8x4xf32>, vector<4x8xf32>, vector<8x8xf32> -> vector<8x8xf32>
    %cst_36 = arith.constant dense<0xFF800000> : vector<8xf32>
    %104 = vector.multi_reduction <maximumf>, %103, %cst_36 [1] : vector<8x8xf32> to vector<8xf32>
    %105 = vector.shape_cast %104 : vector<8xf32> to vector<8x1xf32>
    %106 = vector.broadcast %105 : vector<8x1xf32> to vector<8x8xf32>
    %107 = arith.subf %103, %106 : vector<8x8xf32>
    %108 = math.exp %107 : vector<8x8xf32>
    %cst_37 = arith.constant dense<0.000000e+00> : vector<8xf32>
    %109 = vector.multi_reduction <add>, %108, %cst_37 [1] : vector<8x8xf32> to vector<8xf32>
    %110 = vector.shape_cast %109 : vector<8xf32> to vector<8x1xf32>
    %cst_38 = arith.constant dense<0.000000e+00> : vector<8x4xf32>
    %111 = tpu.matmul %108, %101, %cst_38 {dimension_numbers = #tpu.dot_dimension_numbers<[1], [0], [0], [1], [0, 0, 1, 1], [], []>} : vector<8x8xf32>, vector<8x4xf32>, vector<8x4xf32> -> vector<8x4xf32>
    %112 = tpu.reciprocal %110 {approx = true} : vector<8x1xf32> -> vector<8x1xf32>
    %113 = vector.broadcast %112 : vector<8x1xf32> to vector<8x4xf32>
    %114 = arith.mulf %111, %113 : vector<8x4xf32>
    %c0_39 = arith.constant 0 : index
    %c20 = arith.constant 20 : index
    %115 = vector.load %arg10[%c0_39, %c20] : memref<8x32xf32, #tpu.memory_space<vmem>>, vector<8x4xf32>
    tpu.vector_store %arg10[%c0_39, %c20], %114 {strides = array<i32>} : memref<8x32xf32, #tpu.memory_space<vmem>>, vector<8x4xf32>,
    %116 = vector.extract_strided_slice %11 {offsets = [0, 24], sizes = [8, 4], strides = [1, 1]} : vector<8x32xf32> to vector<8x4xf32>
    %117 = vector.extract_strided_slice %12 {offsets = [0, 24], sizes = [8, 4], strides = [1, 1]} : vector<8x32xf32> to vector<8x4xf32>
    %118 = vector.extract_strided_slice %13 {offsets = [0, 24], sizes = [8, 4], strides = [1, 1]} : vector<8x32xf32> to vector<8x4xf32>
    %119 = tpu.transpose %117, [1, 0] : vector<8x4xf32> -> vector<4x8xf32>
    %cst_40 = arith.constant dense<0.000000e+00> : vector<8x8xf32>
    %120 = tpu.matmul %116, %119, %cst_40 {dimension_numbers = #tpu.dot_dimension_numbers<[1], [0], [0], [1], [0, 0, 1, 1], [], []>} : vector<8x4xf32>, vector<4x8xf32>, vector<8x8xf32> -> vector<8x8xf32>
    %cst_41 = arith.constant dense<0xFF800000> : vector<8xf32>
    %121 = vector.multi_reduction <maximumf>, %120, %cst_41 [1] : vector<8x8xf32> to vector<8xf32>
    %122 = vector.shape_cast %121 : vector<8xf32> to vector<8x1xf32>
    %123 = vector.broadcast %122 : vector<8x1xf32> to vector<8x8xf32>
    %124 = arith.subf %120, %123 : vector<8x8xf32>
    %125 = math.exp %124 : vector<8x8xf32>
    %cst_42 = arith.constant dense<0.000000e+00> : vector<8xf32>
    %126 = vector.multi_reduction <add>, %125, %cst_42 [1] : vector<8x8xf32> to vector<8xf32>
    %127 = vector.shape_cast %126 : vector<8xf32> to vector<8x1xf32>
    %cst_43 = arith.constant dense<0.000000e+00> : vector<8x4xf32>
    %128 = tpu.matmul %125, %118, %cst_43 {dimension_numbers = #tpu.dot_dimension_numbers<[1], [0], [0], [1], [0, 0, 1, 1], [], []>} : vector<8x8xf32>, vector<8x4xf32>, vector<8x4xf32> -> vector<8x4xf32>
    %129 = tpu.reciprocal %127 {approx = true} : vector<8x1xf32> -> vector<8x1xf32>
    %130 = vector.broadcast %129 : vector<8x1xf32> to vector<8x4xf32>
    %131 = arith.mulf %128, %130 : vector<8x4xf32>
    %c0_44 = arith.constant 0 : index
    %c24 = arith.constant 24 : index
    %132 = vector.load %arg10[%c0_44, %c24] : memref<8x32xf32, #tpu.memory_space<vmem>>, vector<8x4xf32>
    tpu.vector_store %arg10[%c0_44, %c24], %131 {strides = array<i32>} : memref<8x32xf32, #tpu.memory_space<vmem>>, vector<8x4xf32>,
    %133 = vector.extract_strided_slice %11 {offsets = [0, 28], sizes = [8, 4], strides = [1, 1]} : vector<8x32xf32> to vector<8x4xf32>
    %134 = vector.extract_strided_slice %12 {offsets = [0, 28], sizes = [8, 4], strides = [1, 1]} : vector<8x32xf32> to vector<8x4xf32>
    %135 = vector.extract_strided_slice %13 {offsets = [0, 28], sizes = [8, 4], strides = [1, 1]} : vector<8x32xf32> to vector<8x4xf32>
    %136 = tpu.transpose %134, [1, 0] : vector<8x4xf32> -> vector<4x8xf32>
    %cst_45 = arith.constant dense<0.000000e+00> : vector<8x8xf32>
    %137 = tpu.matmul %133, %136, %cst_45 {dimension_numbers = #tpu.dot_dimension_numbers<[1], [0], [0], [1], [0, 0, 1, 1], [], []>} : vector<8x4xf32>, vector<4x8xf32>, vector<8x8xf32> -> vector<8x8xf32>
    %cst_46 = arith.constant dense<0xFF800000> : vector<8xf32>
    %138 = vector.multi_reduction <maximumf>, %137, %cst_46 [1] : vector<8x8xf32> to vector<8xf32>
    %139 = vector.shape_cast %138 : vector<8xf32> to vector<8x1xf32>
    %140 = vector.broadcast %139 : vector<8x1xf32> to vector<8x8xf32>
    %141 = arith.subf %137, %140 : vector<8x8xf32>
    %142 = math.exp %141 : vector<8x8xf32>
    %cst_47 = arith.constant dense<0.000000e+00> : vector<8xf32>
    %143 = vector.multi_reduction <add>, %142, %cst_47 [1] : vector<8x8xf32> to vector<8xf32>
    %144 = vector.shape_cast %143 : vector<8xf32> to vector<8x1xf32>
    %cst_48 = arith.constant dense<0.000000e+00> : vector<8x4xf32>
    %145 = tpu.matmul %142, %135, %cst_48 {dimension_numbers = #tpu.dot_dimension_numbers<[1], [0], [0], [1], [0, 0, 1, 1], [], []>} : vector<8x8xf32>, vector<8x4xf32>, vector<8x4xf32> -> vector<8x4xf32>
    %146 = tpu.reciprocal %144 {approx = true} : vector<8x1xf32> -> vector<8x1xf32>
    %147 = vector.broadcast %146 : vector<8x1xf32> to vector<8x4xf32>
    %148 = arith.mulf %145, %147 : vector<8x4xf32>
    %c0_49 = arith.constant 0 : index
    %c28 = arith.constant 28 : index
    %149 = vector.load %arg10[%c0_49, %c28] : memref<8x32xf32, #tpu.memory_space<vmem>>, vector<8x4xf32>
    tpu.vector_store %arg10[%c0_49, %c28], %148 {strides = array<i32>} : memref<8x32xf32, #tpu.memory_space<vmem>>, vector<8x4xf32>,
    %c0_50 = arith.constant 0 : index
    %c0_51 = arith.constant 0 : index
    %150 = vector.load %arg10[%c0_50, %c0_51] : memref<8x32xf32, #tpu.memory_space<vmem>>, vector<8x32xf32>
    %c0_52 = arith.constant 0 : index
    %c0_53 = arith.constant 0 : index
    %151 = vector.load %arg5[%c0_52, %c0_53] : memref<32x32xf32, #tpu.memory_space<vmem>>, vector<32x32xf32>
    %cst_54 = arith.constant dense<0.000000e+00> : vector<8x32xf32>
    %152 = tpu.matmul %150, %151, %cst_54 {dimension_numbers = #tpu.dot_dimension_numbers<[1], [0], [0], [1], [0, 0, 1, 1], [], []>} : vector<8x32xf32>, vector<32x32xf32>, vector<8x32xf32> -> vector<8x32xf32>
    %c0_55 = arith.constant 0 : index
    %c0_56 = arith.constant 0 : index
    %153 = vector.load %arg6[%c0_55, %c0_56] : memref<1x32xf32, #tpu.memory_space<vmem>>, vector<1x32xf32>
    %154 = vector.broadcast %153 : vector<1x32xf32> to vector<8x32xf32>
    %155 = arith.addf %152, %154 : vector<8x32xf32>
    %c0_57 = arith.constant 0 : index
    %c0_58 = arith.constant 0 : index
    %c0_59 = arith.constant 0 : index
    %156 = vector.load %arg7[%c0_57, %c0_58, %c0_59] : memref<1x8x32xf32, #tpu.memory_space<vmem>>, vector<1x8x32xf32>
    %157 = vector.shape_cast %156 : vector<1x8x32xf32> to vector<8x32xf32>
    %158 = vector.shape_cast %155 : vector<8x32xf32> to vector<1x8x32xf32>
    tpu.vector_store %arg7[%c0_57, %c0_58, %c0_59], %158 {strides = array<i32>} : memref<1x8x32xf32, #tpu.memory_space<vmem>>, vector<1x8x32xf32>,
    return
  }
  func.func @transform_0(%arg0: i32, %arg1: i32) -> (i32, i32, i32) {
    %c0_i32 = arith.constant 0 : i32
    %c0_i32_0 = arith.constant 0 : i32
    %c0_i32_1 = arith.constant 0 : i32
    return %arg0, %c0_i32, %c0_i32_0 : i32, i32, i32
  }
  func.func @transform_1(%arg0: i32, %arg1: i32) -> (i32, i32) {
    %c0_i32 = arith.constant 0 : i32
    %c0_i32_0 = arith.constant 0 : i32
    %c0_i32_1 = arith.constant 0 : i32
    return %c0_i32, %c0_i32_0 : i32, i32
  }
  func.func @transform_2(%arg0: i32, %arg1: i32) -> (i32, i32) {
    %c0_i32 = arith.constant 0 : i32
    %c0_i32_0 = arith.constant 0 : i32
    %c0_i32_1 = arith.constant 0 : i32
    return %c0_i32, %c0_i32_0 : i32, i32
  }
  func.func @transform_3(%arg0: i32, %arg1: i32) -> (i32, i32) {
    %c0_i32 = arith.constant 0 : i32
    %c0_i32_0 = arith.constant 0 : i32
    %c0_i32_1 = arith.constant 0 : i32
    return %c0_i32, %c0_i32_0 : i32, i32
  }
  func.func @transform_4(%arg0: i32, %arg1: i32) -> (i32, i32) {
    %c0_i32 = arith.constant 0 : i32
    %c0_i32_0 = arith.constant 0 : i32
    %c0_i32_1 = arith.constant 0 : i32
    return %c0_i32, %c0_i32_0 : i32, i32
  }
  func.func @transform_5(%arg0: i32, %arg1: i32) -> (i32, i32, i32) {
    %c0_i32 = arith.constant 0 : i32
    %c0_i32_0 = arith.constant 0 : i32
    return %arg0, %arg1, %c0_i32 : i32, i32, i32
  }
}

</mosaic_0001>

<llo_original>
// kernel: tpu_custom_call.1
$region0: #{tpu_custom_call.1}
  #allocation0 [shape = 'u32[]', space=smem, size = 0x4, offset = 0x4, fixed_abs, tag = 'smem constant byte address 0x4 - core index']
  #allocation1 [shape = 'u32[144,128]{1,0:T(1,128)}', space=vmem, size = 0x12000, scoped, tag = 'internal scratch']
  #allocation2 [shape = 'f32[8,32]{1,0:T(8,128)}', space=vmem, size = 0x1000, scoped, tag = 'scratch operand']
  #allocation3 [shape = 'f32[8,32]{1,0:T(8,128)}', space=vmem, size = 0x1000, scoped, tag = 'scratch operand']
  #allocation4 [shape = 'f32[8,32]{1,0:T(8,128)}', space=vmem, size = 0x1000, scoped, tag = 'scratch operand']
  %s0 = inlined_call_operand.hbm [shape: f32[2,8,32], index: 0, kind: input, shape index: {}]
  %s1 = inlined_call_operand.hbm [shape: f32[32,32], index: 1, kind: input, shape index: {}]
  %s2 = inlined_call_operand.hbm [shape: f32[32,64], index: 2, kind: input, shape index: {}]
  %s3 = inlined_call_operand.hbm [shape: f32[32,32], index: 3, kind: input, shape index: {}]
  %s4 = inlined_call_operand.vmem [shape: f32[1,32], index: 4, kind: input, shape index: {}]
  %s5 = inlined_call_operand.hbm [shape: f32[2,8,32], index: 5, kind: output, shape index: {}]
  %s6 = sld [smem:[#allocation0]]
  $region73: #{tpu_custom_call.1} parent=0
    _
  %s8 = ssub.s32 1, %s6
  %s9 = scalar_select 0, %s8, %s6
  $region1: #{tpu_custom_call.1} parent=0
    #allocation5 [shape = 'u8[8192]{0}', space=vmem, size = 0x2000, scoped, tag = 'input window, operand 0']
    #allocation6 [shape = 's32[2]{0}', space=sflag, size = 0x8, scoped, tag = 'scoped memory for tpu_custom_call.1']
    #allocation7 [shape = 's32[2]{0}', space=sflag, size = 0x8, scoped, tag = 'scoped memory for tpu_custom_call.1']
    #allocation8 [shape = 'u8[16384]{0}', space=vmem, size = 0x4000, scoped, tag = 'input window, operand 1, single buffered']
    #allocation9 [shape = 's32[1]{0}', space=sflag, size = 0x4, scoped, tag = 'scoped memory for tpu_custom_call.1']
    #allocation10 [shape = 'u8[16384]{0}', space=vmem, size = 0x4000, scoped, tag = 'input window, operand 2, single buffered']
    #allocation11 [shape = 'u8[16384]{0}', space=vmem, size = 0x4000, scoped, tag = 'input window, operand 3, single buffered']
    #allocation12 [shape = 's32[1]{0}', space=sflag, size = 0x4, scoped, tag = 'scoped memory for tpu_custom_call.1']
    #allocation13 [shape = 'u8[8192]{0}', space=vmem, size = 0x2000, scoped, tag = 'output window, operand 0']
    %10 = vsyncpa [#allocation6], 0
    %s11 = scalar_lea.sflag [#allocation6], 1
    %12 = vsyncpa %s11, 0
    %13 = vsyncpa [#allocation9], 0
    %14 = vsyncpa [#allocation12], 0
    %15 = vsyncpa [#allocation7], 0
    %s16 = scalar_lea.sflag [#allocation7], 1
    %17 = vsyncpa %s16, 0
    loop: start=0, step=1, limit=4
    $region2: #{tpu_custom_call.1} parent=1 // loop_pre_header
      _
    $region3: #{tpu_custom_call.1} parent=1 // loop_header
      %s19 = sphi 0, %s23
      %p20 = scmp.ge.s32.totalorder %s19, 4
      %s26 = sphi 0, %s38
      %s27 = sphi 0, %s34
      %s28 = sphi 0, %s26
      %s29 = sphi 0, %s27
      %s30 = sphi 0, %s28
      %s31 = sphi 0, %s29
      %s41 = sphi 0, %s43
      %s44 = sphi 0, %s41
      %s45 = sphi 0, %s44
      %s61 = sphi 0, %s45
      %s65 = sphi 0, %s65
      %s67 = sphi 0, %s65
      %s68 = sphi 0, %s67
      %s82 = sphi 0, %s68
      %s86 = sphi 0, %s86
      %s88 = sphi 0, %s86
      %s89 = sphi 0, %s88
      %s103 = sphi 0, %s89
      %s107 = sphi 0, %s107
      %s109 = sphi 0, %s107
      %s110 = sphi 0, %s109
      %s124 = sphi 0, %s110
      %s128 = sphi 0, %s128
      %s130 = sphi 0, %s128
      %s131 = sphi 0, %s130
      %s145 = sphi 0, %s131
      %s153 = sphi 0, %s155
      %s156 = sphi 0, %s153
      %s157 = sphi 0, %s156
      %s173 = sphi 0, %s157
    $region4: #{tpu_custom_call.1} parent=1 // loop_header_branch
      %22 = sbr.rel (%p20) target = $region8
    $region5: #{tpu_custom_call.1} parent=1 // loop_body
      %s24 = ssub.s32 %s19, 1
      %s25 = ssub.s32 %s19, 2
      %s32 = sadd.s32 1, %s27
      %p33 = scmp.ge.s32.totalorder %s32, 1
      %s34 = scalar_select %p33, 0, %s32
      %s35 = sadd.s32 1, %s26
      %s36 = scalar_select %p33, %s35, %s26
      %p37 = scmp.ge.s32.totalorder %s36, 2
      %s38 = scalar_select %p37, 0, %s36
      %s39 = ssub.s32 %s26, %s38
      %p40 = scmp.eq.s32.totalorder %s39, 0
      %s42 = sadd.s32 %s41, 1
      %s43 = scalar_select %p40, %s41, %s42
      %p46 = pneg %p40
      %p47 = scmp.eq.s32.totalorder %s19, 1
      %p48 = por %p46, %p47
      %p49 = scmp.ne.s32.totalorder %s41, %s44
      %p50 = scmp.eq.s32.totalorder %s19, 0
      %p51 = por %p49, %p50
      %p52 = scmp.ne.s32.totalorder %s41, %s44
      %p53 = scmp.eq.s32.totalorder %s24, 1
      %p54 = por %p52, %p53
      %p55 = scmp.ne.s32.totalorder %s44, %s45
      %p56 = scmp.eq.s32.totalorder %s24, 0
      %p57 = por %p55, %p56
      %p58 = scmp.ne.s32.totalorder %s44, %s45
      %p59 = scmp.eq.s32.totalorder %s25, 1
      %p60 = por %p58, %p59
      %p62 = scmp.ne.s32.totalorder %s45, %s61
      %p63 = scmp.eq.s32.totalorder %s25, 0
      %p64 = por %p62, %p63
      %s66 = sadd.s32 %s65, 1
      %p69 = scmp.eq.s32.totalorder %s19, 1
      %p70 = scmp.ne.s32.totalorder %s65, %s67
      %p71 = scmp.eq.s32.totalorder %s19, 0
      %p72 = por %p70, %p71
      %p73 = scmp.ne.s32.totalorder %s65, %s67
      %p74 = scmp.eq.s32.totalorder %s24, 1
      %p75 = por %p73, %p74
      %p76 = scmp.ne.s32.totalorder %s67, %s68
      %p77 = scmp.eq.s32.totalorder %s24, 0
      %p78 = por %p76, %p77
      %p79 = scmp.ne.s32.totalorder %s67, %s68
      %p80 = scmp.eq.s32.totalorder %s25, 1
      %p81 = por %p79, %p80
      %p83 = scmp.ne.s32.totalorder %s68, %s82
      %p84 = scmp.eq.s32.totalorder %s25, 0
      %p85 = por %p83, %p84
      %s87 = sadd.s32 %s86, 1
      %p90 = scmp.eq.s32.totalorder %s19, 1
      %p91 = scmp.ne.s32.totalorder %s86, %s88
      %p92 = scmp.eq.s32.totalorder %s19, 0
      %p93 = por %p91, %p92
      %p94 = scmp.ne.s32.totalorder %s86, %s88
      %p95 = scmp.eq.s32.totalorder %s24, 1
      %p96 = por %p94, %p95
      %p97 = scmp.ne.s32.totalorder %s88, %s89
      %p98 = scmp.eq.s32.totalorder %s24, 0
      %p99 = por %p97, %p98
      %p100 = scmp.ne.s32.totalorder %s88, %s89
      %p101 = scmp.eq.s32.totalorder %s25, 1
      %p102 = por %p100, %p101
      %p104 = scmp.ne.s32.totalorder %s89, %s103
      %p105 = scmp.eq.s32.totalorder %s25, 0
      %p106 = por %p104, %p105
      %s108 = sadd.s32 %s107, 1
      %p111 = scmp.eq.s32.totalorder %s19, 1
      %p112 = scmp.ne.s32.totalorder %s107, %s109
      %p113 = scmp.eq.s32.totalorder %s19, 0
      %p114 = por %p112, %p113
      %p115 = scmp.ne.s32.totalorder %s107, %s109
      %p116 = scmp.eq.s32.totalorder %s24, 1
      %p117 = por %p115, %p116
      %p118 = scmp.ne.s32.totalorder %s109, %s110
      %p119 = scmp.eq.s32.totalorder %s24, 0
      %p120 = por %p118, %p119
      %p121 = scmp.ne.s32.totalorder %s109, %s110
      %p122 = scmp.eq.s32.totalorder %s25, 1
      %p123 = por %p121, %p122
      %p125 = scmp.ne.s32.totalorder %s110, %s124
      %p126 = scmp.eq.s32.totalorder %s25, 0
      %p127 = por %p125, %p126
      %s129 = sadd.s32 %s128, 1
      %p132 = scmp.eq.s32.totalorder %s19, 1
      %p133 = scmp.ne.s32.totalorder %s128, %s130
      %p134 = scmp.eq.s32.totalorder %s19, 0
      %p135 = por %p133, %p134
      %p136 = scmp.ne.s32.totalorder %s128, %s130
      %p137 = scmp.eq.s32.totalorder %s24, 1
      %p138 = por %p136, %p137
      %p139 = scmp.ne.s32.totalorder %s130, %s131
      %p140 = scmp.eq.s32.totalorder %s24, 0
      %p141 = por %p139, %p140
      %p142 = scmp.ne.s32.totalorder %s130, %s131
      %p143 = scmp.eq.s32.totalorder %s25, 1
      %p144 = por %p142, %p143
      %p146 = scmp.ne.s32.totalorder %s131, %s145
      %p147 = scmp.eq.s32.totalorder %s25, 0
      %p148 = por %p146, %p147
      %s149 = ssub.s32 %s26, %s38
      %s150 = ssub.s32 %s27, %s34
      %s151 = sor.u32 %s149, %s150
      %p152 = scmp.eq.s32.totalorder %s151, 0
      %s154 = sadd.s32 %s153, 1
      %s155 = scalar_select %p152, %s153, %s154
      %p158 = pneg %p152
      %p159 = scmp.eq.s32.totalorder %s19, 1
      %p160 = por %p158, %p159
      %p161 = scmp.ne.s32.totalorder %s153, %s156
      %p162 = scmp.eq.s32.totalorder %s19, 0
      %p163 = por %p161, %p162
      %p164 = scmp.ne.s32.totalorder %s153, %s156
      %p165 = scmp.eq.s32.totalorder %s24, 1
      %p166 = por %p164, %p165
      %p167 = scmp.ne.s32.totalorder %s156, %s157
      %p168 = scmp.eq.s32.totalorder %s24, 0
      %p169 = por %p167, %p168
      %p170 = scmp.ne.s32.totalorder %s156, %s157
      %p171 = scmp.eq.s32.totalorder %s25, 1
      %p172 = por %p170, %p171
      %p174 = scmp.ne.s32.totalorder %s157, %s173
      %p175 = scmp.eq.s32.totalorder %s25, 0
      %p176 = por %p174, %p175
      %p177 = scmp.le.s32.totalorder 1, %s19
      %p178 = scmp.lt.s32.totalorder %s19, 3
      %p179 = pnand %p177, %p178
      %p180 = pneg %p179
      // Predicated region
      $region9: #{tpu_custom_call.1} parent=5 // pred_check
        _
      $region10: #{tpu_custom_call.1} parent=5 // pred_check_branch
        %182 = sbr.rel (%p179) target = $region12
      $region11: #{tpu_custom_call.1} parent=5 // pred_region
        %s183 = ssub.s32 %s19, 1
        // Predicated region
        $region13: #{tpu_custom_call.1} parent=11 // pred_check
          %p184 = pneg %p78
        $region14: #{tpu_custom_call.1} parent=11 // pred_check_branch
          %186 = sbr.rel (%p184) target = $region16
        $region15: #{tpu_custom_call.1} parent=11 // pred_region
          %s188 = ssub.s32 512, 512
          %189 = vsyncadd [#allocation9], %s188
          %s190 = sshll.u32 [#allocation8], 4
          %s191 = int_to_ptr.vmem [resolvable:$true] %s190
          %196 = dma.hbm_to_vmem [thread:$0]  %s1, 512, %s191, [#allocation9], 128, 128, 8
        $region16: #{tpu_custom_call.1} parent=11 // pred_fallthru
          _
        // Predicated region
        $region17: #{tpu_custom_call.1} parent=11 // pred_check
          %p197 = pneg %p99
        $region18: #{tpu_custom_call.1} parent=11 // pred_check_branch
          %199 = sbr.rel (%p197) target = $region20
        $region19: #{tpu_custom_call.1} parent=11 // pred_region
          %s201 = ssub.s32 512, 512
          %202 = vsyncadd [#allocation9], %s201
          %s203 = sshll.u32 [#allocation10], 4
          %s204 = int_to_ptr.vmem [resolvable:$true] %s203
          %209 = dma.hbm_to_vmem [thread:$0]  %s2, 512, %s204, [#allocation9], 128, 128, 8
        $region20: #{tpu_custom_call.1} parent=11 // pred_fallthru
          _
        // Predicated region
        $region21: #{tpu_custom_call.1} parent=11 // pred_check
          %p210 = pneg %p120
        $region22: #{tpu_custom_call.1} parent=11 // pred_check_branch
          %212 = sbr.rel (%p210) target = $region24
        $region23: #{tpu_custom_call.1} parent=11 // pred_region
          %s214 = ssub.s32 512, 512
          %215 = vsyncadd [#allocation12], %s214
          %s216 = sshll.u32 [#allocation11], 4
          %s217 = int_to_ptr.vmem [resolvable:$true] %s216
          %222 = dma.hbm_to_vmem [thread:$0]  %s3, 512, %s217, [#allocation12], 128, 128, 8
        $region24: #{tpu_custom_call.1} parent=11 // pred_fallthru
          _
        // Predicated region
        $region25: #{tpu_custom_call.1} parent=11 // pred_check
          %p223 = pneg %p141
        $region26: #{tpu_custom_call.1} parent=11 // pred_check_branch
          %225 = sbr.rel (%p223) target = $region28
        $region27: #{tpu_custom_call.1} parent=11 // pred_region
          _
        $region28: #{tpu_custom_call.1} parent=11 // pred_fallthru
          _
      $region12: #{tpu_custom_call.1} parent=5 // pred_fallthru
        _
      %p226 = scmp.lt.s32.totalorder %s19, 2
      // Predicated region
      $region29: #{tpu_custom_call.1} parent=5 // pred_check
        %p227 = pneg %p226
      $region30: #{tpu_custom_call.1} parent=5 // pred_check_branch
        %229 = sbr.rel (%p227) target = $region32
      $region31: #{tpu_custom_call.1} parent=5 // pred_region
        // Predicated region
        $region33: #{tpu_custom_call.1} parent=31 // pred_check
          %p230 = pneg %p51
        $region34: #{tpu_custom_call.1} parent=31 // pred_check_branch
          %232 = sbr.rel (%p230) target = $region36
        $region35: #{tpu_custom_call.1} parent=31 // pred_region
          %s233 = sand.u32 %s41, 1
          %s234 = scalar_lea.sflag [#allocation6], %s233
          %s235 = sand.u32 %s41, 1
          %s236 = smul.addr %s235, 8
          %s237 = scalar_lea.vmem [#allocation5], %s236
          %s239 = ssub.s32 128, 128
          %240 = vsyncadd %s234, %s239
          %s241 = smul.addr %s26, 128
          %s242 = scalar_lea.hbm %s0, %s241
          %s244 = sshll.u32 %s237, 4
          %s245 = int_to_ptr.vmem [resolvable:$true] %s244
          %247 = dma.hbm_to_vmem [thread:$0]  %s242, 128, %s245, %s234
        $region36: #{tpu_custom_call.1} parent=31 // pred_fallthru
          _
      $region32: #{tpu_custom_call.1} parent=5 // pred_fallthru
        _
      %p248 = scmp.le.s32.totalorder 1, %s19
      %p249 = scmp.lt.s32.totalorder %s19, 3
      %p250 = pnand %p248, %p249
      %p251 = pneg %p250
      // Predicated region
      $region37: #{tpu_custom_call.1} parent=5 // pred_check
        _
      $region38: #{tpu_custom_call.1} parent=5 // pred_check_branch
        %253 = sbr.rel (%p250) target = $region40
      $region39: #{tpu_custom_call.1} parent=5 // pred_region
        %s254 = ssub.s32 %s19, 1
        %s255 = sand.u32 %s44, 1
        %s256 = scalar_lea.sflag [#allocation6], %s255
        %s257 = sand.u32 %s44, 1
        %s258 = smul.addr %s257, 8
        %s259 = scalar_lea.vmem [#allocation5], %s258
        // Predicated region
        $region41: #{tpu_custom_call.1} parent=39 // pred_check
          %p260 = pneg %p57
        $region42: #{tpu_custom_call.1} parent=39 // pred_check_branch
          %262 = sbr.rel (%p260) target = $region44
        $region43: #{tpu_custom_call.1} parent=39 // pred_region
          %263 = dma.done %s256, 128
        $region44: #{tpu_custom_call.1} parent=39 // pred_fallthru
          _
        // Predicated region
        $region45: #{tpu_custom_call.1} parent=39 // pred_check
          %p264 = pneg %p78
        $region46: #{tpu_custom_call.1} parent=39 // pred_check_branch
          %266 = sbr.rel (%p264) target = $region48
        $region47: #{tpu_custom_call.1} parent=39 // pred_region
          %267 = dma.done [#allocation9], 512
        $region48: #{tpu_custom_call.1} parent=39 // pred_fallthru
          _
        // Predicated region
        $region49: #{tpu_custom_call.1} parent=39 // pred_check
          %p268 = pneg %p99
        $region50: #{tpu_custom_call.1} parent=39 // pred_check_branch
          %270 = sbr.rel (%p268) target = $region52
        $region51: #{tpu_custom_call.1} parent=39 // pred_region
          %271 = dma.done [#allocation9], 512
        $region52: #{tpu_custom_call.1} parent=39 // pred_fallthru
          _
        // Predicated region
        $region53: #{tpu_custom_call.1} parent=39 // pred_check
          %p272 = pneg %p120
        $region54: #{tpu_custom_call.1} parent=39 // pred_check_branch
          %274 = sbr.rel (%p272) target = $region56
        $region55: #{tpu_custom_call.1} parent=39 // pred_region
          %275 = dma.done [#allocation12], 512
        $region56: #{tpu_custom_call.1} parent=39 // pred_fallthru
          _
        %s276 = sand.u32 %s44, 1
        %s277 = scalar_lea.sflag [#allocation6], %s276
        %s278 = sand.u32 %s44, 1
        %s279 = smul.addr %s278, 8
        %s280 = scalar_lea.vmem [#allocation5], %s279
        %p281 = pneg %p57
        %p282 = pneg %p54
        %p283 = pneg %p78
        %p284 = pneg %p75
        %p285 = pneg %p99
        %p286 = pneg %p96
        %p287 = pneg %p120
        %p288 = pneg %p117
        %p289 = pneg %p141
        %p290 = pneg %p138
        %p291 = pneg %p169
        %p292 = pneg %p166
        %s293 = sand.u32 %s156, 1
        %s294 = scalar_lea.sflag [#allocation7], %s293
        %s295 = sand.u32 %s156, 1
        %s296 = smul.addr %s295, 8
        %s297 = scalar_lea.vmem [#allocation13], %s296
        %p298 = scmp.eq.s32.totalorder %s29, 0
        // Predicated region
        $region57: #{tpu_custom_call.1} parent=39 // pred_check
          %p299 = pneg %p298
        $region58: #{tpu_custom_call.1} parent=39 // pred_check_branch
          %301 = sbr.rel (%p299) target = $region60
        $region59: #{tpu_custom_call.1} parent=39 // pred_region
          %v302 = vld [vmem:[%s259] sm:$0xff]
          %v303 = vld [vmem:[#allocation10] sm:$0xff]
          %v304 = vld [vmem:[#allocation10 + $0x8] sm:$0xff]
          %v305 = vld [vmem:[#allocation10 + $0x10] sm:$0xff]
          %v306 = vld [vmem:[#allocation10 + $0x18] sm:$0xff]
          %vm307 = vcmask 261120
          %v309 = vsel %vm307, %v302, 0
          %311 = vmatprep.subr.mxu0 0.0
          %312 = vmatpush1.msra.mxu0 0.0
          %313 = vmatprep.subr.mxu0 0.0
          %314 = vmatpush1.msra.mxu0 0.0
          %315 = vmatprep.subr.mxu0 0.0
          %316 = vmatpush1.msra.mxu0 0.0
          %317 = vmatprep.subr.mxu0 0.0
          %318 = vmatpush1.msra.mxu0 0.0
          %319 = vmatprep.subr.mxu0 0.0
          %320 = vmatpush1.msra.mxu0 0.0
          %321 = vmatprep.subr.mxu0 0.0
          %322 = vmatpush1.msra.mxu0 0.0
          %323 = vmatprep.subr.mxu0 0.0
          %324 = vmatpush1.msra.mxu0 0.0
          %325 = vmatprep.subr.mxu0 0.0
          %326 = vmatpush1.msra.mxu0 0.0
          %327 = vmatprep.subr.mxu0 0.0
          %328 = vmatpush1.msra.mxu0 0.0
          %329 = vmatprep.subr.mxu0 0.0
          %330 = vmatpush1.msra.mxu0 0.0
          %331 = vmatprep.subr.mxu0 0.0
          %332 = vmatpush1.msra.mxu0 0.0
          %333 = vmatprep.subr.mxu0 0.0
          %334 = vmatpush1.msra.mxu0 0.0
          %335 = vmatprep.subr.mxu0 0.0
          %336 = vmatpush1.msra.mxu0 %v306
          %337 = vmatprep.subr.mxu0 0.0
          %338 = vmatpush1.msra.mxu0 %v305
          %339 = vmatprep.subr.mxu0 0.0
          %340 = vmatpush1.msra.mxu0 %v304
          %341 = vmatprep.subr.mxu0 0.0
          %342 = vmatpush1.msra.mxu0 %v303
          %343 = vmatprep.subr.mxu0 0.0
          %344 = vmatpush2.msra.mxu0 0.0
          %345 = vmatprep.subr.mxu0 0.0
          %346 = vmatpush2.msra.mxu0 0.0
          %347 = vmatprep.subr.mxu0 0.0
          %348 = vmatpush2.msra.mxu0 0.0
          %349 = vmatprep.subr.mxu0 0.0
          %350 = vmatpush2.msra.mxu0 0.0
          %351 = vmatprep.subr.mxu0 0.0
          %352 = vmatpush2.msra.mxu0 0.0
          %353 = vmatprep.subr.mxu0 0.0
          %354 = vmatpush2.msra.mxu0 0.0
          %355 = vmatprep.subr.mxu0 0.0
          %356 = vmatpush2.msra.mxu0 0.0
          %357 = vmatprep.subr.mxu0 0.0
          %358 = vmatpush2.msra.mxu0 0.0
          %359 = vmatprep.subr.mxu0 0.0
          %360 = vmatpush2.msra.mxu0 0.0
          %361 = vmatprep.subr.mxu0 0.0
          %362 = vmatpush2.msra.mxu0 0.0
          %363 = vmatprep.subr.mxu0 0.0
          %364 = vmatpush2.msra.mxu0 0.0
          %365 = vmatprep.subr.mxu0 0.0
          %366 = vmatpush2.msra.mxu0 0.0
          %367 = vmatprep.subr.mxu0 0.0
          %368 = vmatpush2.msra.mxu0 0.0
          %369 = vmatprep.subr.mxu0 0.0
          %370 = vmatpush2.msra.mxu0 0.0
          %371 = vmatprep.subr.mxu0 0.0
          %372 = vmatpush2.msra.mxu0 0.0
          %373 = vmatprep.subr.mxu0 0.0
          %374 = vmatpush2.msra.mxu0 0.0
          %375 = vmatprep.mubr.f32.mxu0 0.0
          %376 = vmatmul.mubr.f32.gmra.mxu0 %v309
          %v377 = vpop.f32.mrf.mxu0
          %v378 = vadd.f32 0.0, %v377
          %v379 = vpop.f32.mrf.mxu0
          %380 = vdwg.mxu0
          %381 = vst.msk [vmem:[#allocation2] sm:$0xff] %vm307, %v378
          %383 = vrot.lane.b32.xlu0 %v378, 96
          %v384 = vpop.permute.xlu0 %383
          %386 = vst.msk [vmem:[#allocation3] sm:$0xff] %vm307, %v384
        $region60: #{tpu_custom_call.1} parent=39 // pred_fallthru
          _
        %s387 = smul.u32 %s29, 8
        %s388 = scalar_lea.vmem %s259, %s387 [#allocation5]
        %v389 = vld [vmem:[%s388] sm:$0xff]
        %v390 = vld [vmem:[#allocation8] sm:$0xff]
        %v391 = vld [vmem:[#allocation8 + $0x8] sm:$0xff]
        %v392 = vld [vmem:[#allocation8 + $0x10] sm:$0xff]
        %v393 = vld [vmem:[#allocation8 + $0x18] sm:$0xff]
        %vm394 = vcmask 261120
        %v396 = vsel %vm394, %v389, 0
        %398 = vmatprep.subr.mxu0 0.0
        %399 = vmatpush1.msra.mxu0 0.0
        %400 = vmatprep.subr.mxu0 0.0
        %401 = vmatpush1.msra.mxu0 0.0
        %402 = vmatprep.subr.mxu0 0.0
        %403 = vmatpush1.msra.mxu0 0.0
        %404 = vmatprep.subr.mxu0 0.0
        %405 = vmatpush1.msra.mxu0 0.0
        %406 = vmatprep.subr.mxu0 0.0
        %407 = vmatpush1.msra.mxu0 0.0
        %408 = vmatprep.subr.mxu0 0.0
        %409 = vmatpush1.msra.mxu0 0.0
        %410 = vmatprep.subr.mxu0 0.0
        %411 = vmatpush1.msra.mxu0 0.0
        %412 = vmatprep.subr.mxu0 0.0
        %413 = vmatpush1.msra.mxu0 0.0
        %414 = vmatprep.subr.mxu0 0.0
        %415 = vmatpush1.msra.mxu0 0.0
        %416 = vmatprep.subr.mxu0 0.0
        %417 = vmatpush1.msra.mxu0 0.0
        %418 = vmatprep.subr.mxu0 0.0
        %419 = vmatpush1.msra.mxu0 0.0
        %420 = vmatprep.subr.mxu0 0.0
        %421 = vmatpush1.msra.mxu0 0.0
        %422 = vmatprep.subr.mxu0 0.0
        %423 = vmatpush1.msra.mxu0 %v393
        %424 = vmatprep.subr.mxu0 0.0
        %425 = vmatpush1.msra.mxu0 %v392
        %426 = vmatprep.subr.mxu0 0.0
        %427 = vmatpush1.msra.mxu0 %v391
        %428 = vmatprep.subr.mxu0 0.0
        %429 = vmatpush1.msra.mxu0 %v390
        %430 = vmatprep.subr.mxu0 0.0
        %431 = vmatpush2.msra.mxu0 0.0
        %432 = vmatprep.subr.mxu0 0.0
        %433 = vmatpush2.msra.mxu0 0.0
        %434 = vmatprep.subr.mxu0 0.0
        %435 = vmatpush2.msra.mxu0 0.0
        %436 = vmatprep.subr.mxu0 0.0
        %437 = vmatpush2.msra.mxu0 0.0
        %438 = vmatprep.subr.mxu0 0.0
        %439 = vmatpush2.msra.mxu0 0.0
        %440 = vmatprep.subr.mxu0 0.0
        %441 = vmatpush2.msra.mxu0 0.0
        %442 = vmatprep.subr.mxu0 0.0
        %443 = vmatpush2.msra.mxu0 0.0
        %444 = vmatprep.subr.mxu0 0.0
        %445 = vmatpush2.msra.mxu0 0.0
        %446 = vmatprep.subr.mxu0 0.0
        %447 = vmatpush2.msra.mxu0 0.0
        %448 = vmatprep.subr.mxu0 0.0
        %449 = vmatpush2.msra.mxu0 0.0
        %450 = vmatprep.subr.mxu0 0.0
        %451 = vmatpush2.msra.mxu0 0.0
        %452 = vmatprep.subr.mxu0 0.0
        %453 = vmatpush2.msra.mxu0 0.0
        %454 = vmatprep.subr.mxu0 0.0
        %455 = vmatpush2.msra.mxu0 0.0
        %456 = vmatprep.subr.mxu0 0.0
        %457 = vmatpush2.msra.mxu0 0.0
        %458 = vmatprep.subr.mxu0 0.0
        %459 = vmatpush2.msra.mxu0 0.0
        %460 = vmatprep.subr.mxu0 0.0
        %461 = vmatpush2.msra.mxu0 0.0
        %462 = vmatprep.mubr.f32.mxu0 0.0
        %463 = vmatmul.mubr.f32.gmra.mxu0 %v396
        %v464 = vpop.f32.mrf.mxu0
        %v465 = vadd.f32 0.0, %v464
        %v466 = vpop.f32.mrf.mxu0
        %467 = vdwg.mxu0
        %v468 = vmul.f32 %v465, 0.5
        %v469 = vld [vmem:[#allocation2] sm:$0xff]
        %v470 = vld [vmem:[#allocation3] sm:$0xff]
        %vm471 = vcmask 31744
        %v473 = vsel %vm471, %v468, 0
        %v476 = vsel %vm471, %v469, 0
        %478 = vmatprep.subr.mxu0 0.0
        %479 = vmatpush1.xpose.msra.mxu0 0.0
        %480 = vmatprep.subr.mxu0 0.0
        %481 = vmatpush1.xpose.msra.mxu0 0.0
        %482 = vmatprep.subr.mxu0 0.0
        %483 = vmatpush1.xpose.msra.mxu0 0.0
        %484 = vmatprep.subr.mxu0 0.0
        %485 = vmatpush1.xpose.msra.mxu0 0.0
        %486 = vmatprep.subr.mxu0 0.0
        %487 = vmatpush1.xpose.msra.mxu0 0.0
        %488 = vmatprep.subr.mxu0 0.0
        %489 = vmatpush1.xpose.msra.mxu0 0.0
        %490 = vmatprep.subr.mxu0 0.0
        %491 = vmatpush1.xpose.msra.mxu0 0.0
        %492 = vmatprep.subr.mxu0 0.0
        %493 = vmatpush1.xpose.msra.mxu0 0.0
        %494 = vmatprep.subr.mxu0 0.0
        %495 = vmatpush1.xpose.msra.mxu0 0.0
        %496 = vmatprep.subr.mxu0 0.0
        %497 = vmatpush1.xpose.msra.mxu0 0.0
        %498 = vmatprep.subr.mxu0 0.0
        %499 = vmatpush1.xpose.msra.mxu0 0.0
        %500 = vmatprep.subr.mxu0 0.0
        %501 = vmatpush1.xpose.msra.mxu0 0.0
        %502 = vmatprep.subr.mxu0 0.0
        %503 = vmatpush1.xpose.msra.mxu0 0.0
        %504 = vmatprep.subr.mxu0 0.0
        %505 = vmatpush1.xpose.msra.mxu0 0.0
        %506 = vmatprep.subr.mxu0 0.0
        %507 = vmatpush1.xpose.msra.mxu0 0.0
        %508 = vmatprep.subr.mxu0 0.0
        %509 = vmatpush1.xpose.msra.mxu0 %v476
        %510 = vmatprep.subr.mxu0 0.0
        %511 = vmatpush2.xpose.msra.mxu0 0.0
        %512 = vmatprep.subr.mxu0 0.0
        %513 = vmatpush2.xpose.msra.mxu0 0.0
        %514 = vmatprep.subr.mxu0 0.0
        %515 = vmatpush2.xpose.msra.mxu0 0.0
        %516 = vmatprep.subr.mxu0 0.0
        %517 = vmatpush2.xpose.msra.mxu0 0.0
        %518 = vmatprep.subr.mxu0 0.0
        %519 = vmatpush2.xpose.msra.mxu0 0.0
        %520 = vmatprep.subr.mxu0 0.0
        %521 = vmatpush2.xpose.msra.mxu0 0.0
        %522 = vmatprep.subr.mxu0 0.0
        %523 = vmatpush2.xpose.msra.mxu0 0.0
        %524 = vmatprep.subr.mxu0 0.0
        %525 = vmatpush2.xpose.msra.mxu0 0.0
        %526 = vmatprep.subr.mxu0 0.0
        %527 = vmatpush2.xpose.msra.mxu0 0.0
        %528 = vmatprep.subr.mxu0 0.0
        %529 = vmatpush2.xpose.msra.mxu0 0.0
        %530 = vmatprep.subr.mxu0 0.0
        %531 = vmatpush2.xpose.msra.mxu0 0.0
        %532 = vmatprep.subr.mxu0 0.0
        %533 = vmatpush2.xpose.msra.mxu0 0.0
        %534 = vmatprep.subr.mxu0 0.0
        %535 = vmatpush2.xpose.msra.mxu0 0.0
        %536 = vmatprep.subr.mxu0 0.0
        %537 = vmatpush2.xpose.msra.mxu0 0.0
        %538 = vmatprep.subr.mxu0 0.0
        %539 = vmatpush2.xpose.msra.mxu0 0.0
        %540 = vmatprep.subr.mxu0 0.0
        %541 = vmatpush2.xpose.msra.mxu0 0.0
        %542 = vmatprep.mubr.f32.mxu0 0.0
        %543 = vmatmul.mubr.f32.gmra.mxu0 %v473
        %v544 = vpop.f32.mrf.mxu0
        %v545 = vadd.f32 0.0, %v544
        %v546 = vpop.f32.mrf.mxu0
        %547 = vdwg.mxu0
        %vm548 = vcmask 64512
        %v549 = vsel %vm548, %v545, -inf
        %550 = vmax.xlane.f32.xlu0 %v549
        %v551 = vpop.xlane.xlu0 %550
        %v552 = vsub.f32 %v545, %v551
        %v553 = vmul.f32 %v552, 1.442695
        %v554 = vpow.pop %v553
        %v555 = vsel %vm548, %v554, 0.0
        %556 = vadd.xlane.f32.xlu0 %v555
        %v557 = vpop.xlane.xlu0 %556
        %v559 = vsel %vm548, %v554, 0
        %561 = vmatprep.subr.mxu0 0.0
        %562 = vmatpush1.msra.mxu0 0.0
        %563 = vmatprep.subr.mxu0 0.0
        %564 = vmatpush1.msra.mxu0 0.0
        %565 = vmatprep.subr.mxu0 0.0
        %566 = vmatpush1.msra.mxu0 0.0
        %567 = vmatprep.subr.mxu0 0.0
        %568 = vmatpush1.msra.mxu0 0.0
        %569 = vmatprep.subr.mxu0 0.0
        %570 = vmatpush1.msra.mxu0 0.0
        %571 = vmatprep.subr.mxu0 0.0
        %572 = vmatpush1.msra.mxu0 0.0
        %573 = vmatprep.subr.mxu0 0.0
        %574 = vmatpush1.msra.mxu0 0.0
        %575 = vmatprep.subr.mxu0 0.0
        %576 = vmatpush1.msra.mxu0 0.0
        %577 = vmatprep.subr.mxu0 0.0
        %578 = vmatpush1.msra.mxu0 0.0
        %579 = vmatprep.subr.mxu0 0.0
        %580 = vmatpush1.msra.mxu0 0.0
        %581 = vmatprep.subr.mxu0 0.0
        %582 = vmatpush1.msra.mxu0 0.0
        %583 = vmatprep.subr.mxu0 0.0
        %584 = vmatpush1.msra.mxu0 0.0
        %585 = vmatprep.subr.mxu0 0.0
        %586 = vmatpush1.msra.mxu0 0.0
        %587 = vmatprep.subr.mxu0 0.0
        %588 = vmatpush1.msra.mxu0 0.0
        %589 = vmatprep.subr.mxu0 0.0
        %590 = vmatpush1.msra.mxu0 0.0
        %591 = vmatprep.subr.mxu0 0.0
        %592 = vmatpush1.msra.mxu0 %v470
        %593 = vmatprep.subr.mxu0 0.0
        %594 = vmatpush2.msra.mxu0 0.0
        %595 = vmatprep.subr.mxu0 0.0
        %596 = vmatpush2.msra.mxu0 0.0
        %597 = vmatprep.subr.mxu0 0.0
        %598 = vmatpush2.msra.mxu0 0.0
        %599 = vmatprep.subr.mxu0 0.0
        %600 = vmatpush2.msra.mxu0 0.0
        %601 = vmatprep.subr.mxu0 0.0
        %602 = vmatpush2.msra.mxu0 0.0
        %603 = vmatprep.subr.mxu0 0.0
        %604 = vmatpush2.msra.mxu0 0.0
        %605 = vmatprep.subr.mxu0 0.0
        %606 = vmatpush2.msra.mxu0 0.0
        %607 = vmatprep.subr.mxu0 0.0
        %608 = vmatpush2.msra.mxu0 0.0
        %609 = vmatprep.subr.mxu0 0.0
        %610 = vmatpush2.msra.mxu0 0.0
        %611 = vmatprep.subr.mxu0 0.0
        %612 = vmatpush2.msra.mxu0 0.0
        %613 = vmatprep.subr.mxu0 0.0
        %614 = vmatpush2.msra.mxu0 0.0
        %615 = vmatprep.subr.mxu0 0.0
        %616 = vmatpush2.msra.mxu0 0.0
        %617 = vmatprep.subr.mxu0 0.0
        %618 = vmatpush2.msra.mxu0 0.0
        %619 = vmatprep.subr.mxu0 0.0
        %620 = vmatpush2.msra.mxu0 0.0
        %621 = vmatprep.subr.mxu0 0.0
        %622 = vmatpush2.msra.mxu0 0.0
        %623 = vmatprep.subr.mxu0 0.0
        %624 = vmatpush2.msra.mxu0 0.0
        %625 = vmatprep.mubr.f32.mxu0 0.0
        %626 = vmatmul.mubr.f32.gmra.mxu0 %v559
        %v627 = vpop.f32.mrf.mxu0
        %v628 = vadd.f32 0.0, %v627
        %v629 = vpop.f32.mrf.mxu0
        %630 = vdwg.mxu0
        %v631 = vrcp.pop %v557
        %v632 = vmul.f32 %v628, %v631
        %633 = vst.msk [vmem:[#allocation4] sm:$0xff] %vm471, %v632
        %634 = vrot.lane.b32.xlu0 %v468, 124
        %v635 = vpop.permute.xlu0 %634
        %636 = vrot.lane.b32.xlu0 %v469, 124
        %v637 = vpop.permute.xlu0 %636
        %v638 = vsel %vm471, %v635, 0
        %v640 = vsel %vm471, %v637, 0
        %642 = vmatprep.subr.mxu0 0.0
        %643 = vmatpush1.xpose.msra.mxu0 0.0
        %644 = vmatprep.subr.mxu0 0.0
        %645 = vmatpush1.xpose.msra.mxu0 0.0
        %646 = vmatprep.subr.mxu0 0.0
        %647 = vmatpush1.xpose.msra.mxu0 0.0
        %648 = vmatprep.subr.mxu0 0.0
        %649 = vmatpush1.xpose.msra.mxu0 0.0
        %650 = vmatprep.subr.mxu0 0.0
        %651 = vmatpush1.xpose.msra.mxu0 0.0
        %652 = vmatprep.subr.mxu0 0.0
        %653 = vmatpush1.xpose.msra.mxu0 0.0
        %654 = vmatprep.subr.mxu0 0.0
        %655 = vmatpush1.xpose.msra.mxu0 0.0
        %656 = vmatprep.subr.mxu0 0.0
        %657 = vmatpush1.xpose.msra.mxu0 0.0
        %658 = vmatprep.subr.mxu0 0.0
        %659 = vmatpush1.xpose.msra.mxu0 0.0
        %660 = vmatprep.subr.mxu0 0.0
        %661 = vmatpush1.xpose.msra.mxu0 0.0
        %662 = vmatprep.subr.mxu0 0.0
        %663 = vmatpush1.xpose.msra.mxu0 0.0
        %664 = vmatprep.subr.mxu0 0.0
        %665 = vmatpush1.xpose.msra.mxu0 0.0
        %666 = vmatprep.subr.mxu0 0.0
        %667 = vmatpush1.xpose.msra.mxu0 0.0
        %668 = vmatprep.subr.mxu0 0.0
        %669 = vmatpush1.xpose.msra.mxu0 0.0
        %670 = vmatprep.subr.mxu0 0.0
        %671 = vmatpush1.xpose.msra.mxu0 0.0
        %672 = vmatprep.subr.mxu0 0.0
        %673 = vmatpush1.xpose.msra.mxu0 %v640
        %674 = vmatprep.subr.mxu0 0.0
        %675 = vmatpush2.xpose.msra.mxu0 0.0
        %676 = vmatprep.subr.mxu0 0.0
        %677 = vmatpush2.xpose.msra.mxu0 0.0
        %678 = vmatprep.subr.mxu0 0.0
        %679 = vmatpush2.xpose.msra.mxu0 0.0
        %680 = vmatprep.subr.mxu0 0.0
        %681 = vmatpush2.xpose.msra.mxu0 0.0
        %682 = vmatprep.subr.mxu0 0.0
        %683 = vmatpush2.xpose.msra.mxu0 0.0
        %684 = vmatprep.subr.mxu0 0.0
        %685 = vmatpush2.xpose.msra.mxu0 0.0
        %686 = vmatprep.subr.mxu0 0.0
        %687 = vmatpush2.xpose.msra.mxu0 0.0
        %688 = vmatprep.subr.mxu0 0.0
        %689 = vmatpush2.xpose.msra.mxu0 0.0
        %690 = vmatprep.subr.mxu0 0.0
        %691 = vmatpush2.xpose.msra.mxu0 0.0
        %692 = vmatprep.subr.mxu0 0.0
        %693 = vmatpush2.xpose.msra.mxu0 0.0
        %694 = vmatprep.subr.mxu0 0.0
        %695 = vmatpush2.xpose.msra.mxu0 0.0
        %696 = vmatprep.subr.mxu0 0.0
        %697 = vmatpush2.xpose.msra.mxu0 0.0
        %698 = vmatprep.subr.mxu0 0.0
        %699 = vmatpush2.xpose.msra.mxu0 0.0
        %700 = vmatprep.subr.mxu0 0.0
        %701 = vmatpush2.xpose.msra.mxu0 0.0
        %702 = vmatprep.subr.mxu0 0.0
        %703 = vmatpush2.xpose.msra.mxu0 0.0
        %704 = vmatprep.subr.mxu0 0.0
        %705 = vmatpush2.xpose.msra.mxu0 0.0
        %706 = vmatprep.mubr.f32.mxu0 0.0
        %707 = vmatmul.mubr.f32.gmra.mxu0 %v638
        %v708 = vpop.f32.mrf.mxu0
        %v709 = vadd.f32 0.0, %v708
        %v710 = vpop.f32.mrf.mxu0
        %711 = vdwg.mxu0
        %v712 = vsel %vm548, %v709, -inf
        %713 = vmax.xlane.f32.xlu0 %v712
        %v714 = vpop.xlane.xlu0 %713
        %v715 = vsub.f32 %v709, %v714
        %v716 = vmul.f32 %v715, 1.442695
        %v717 = vpow.pop %v716
        %v718 = vsel %vm548, %v717, 0.0
        %719 = vadd.xlane.f32.xlu0 %v718
        %v720 = vpop.xlane.xlu0 %719
        %722 = vrot.lane.b32.xlu0 %v470, 124
        %v723 = vpop.permute.xlu0 %722
        %v726 = vsel %vm548, %v717, 0
        %728 = vmatprep.subr.mxu0 0.0
        %729 = vmatpush1.msra.mxu0 0.0
        %730 = vmatprep.subr.mxu0 0.0
        %731 = vmatpush1.msra.mxu0 0.0
        %732 = vmatprep.subr.mxu0 0.0
        %733 = vmatpush1.msra.mxu0 0.0
        %734 = vmatprep.subr.mxu0 0.0
        %735 = vmatpush1.msra.mxu0 0.0
        %736 = vmatprep.subr.mxu0 0.0
        %737 = vmatpush1.msra.mxu0 0.0
        %738 = vmatprep.subr.mxu0 0.0
        %739 = vmatpush1.msra.mxu0 0.0
        %740 = vmatprep.subr.mxu0 0.0
        %741 = vmatpush1.msra.mxu0 0.0
        %742 = vmatprep.subr.mxu0 0.0
        %743 = vmatpush1.msra.mxu0 0.0
        %744 = vmatprep.subr.mxu0 0.0
        %745 = vmatpush1.msra.mxu0 0.0
        %746 = vmatprep.subr.mxu0 0.0
        %747 = vmatpush1.msra.mxu0 0.0
        %748 = vmatprep.subr.mxu0 0.0
        %749 = vmatpush1.msra.mxu0 0.0
        %750 = vmatprep.subr.mxu0 0.0
        %751 = vmatpush1.msra.mxu0 0.0
        %752 = vmatprep.subr.mxu0 0.0
        %753 = vmatpush1.msra.mxu0 0.0
        %754 = vmatprep.subr.mxu0 0.0
        %755 = vmatpush1.msra.mxu0 0.0
        %756 = vmatprep.subr.mxu0 0.0
        %757 = vmatpush1.msra.mxu0 0.0
        %758 = vmatprep.subr.mxu0 0.0
        %759 = vmatpush1.msra.mxu0 %v723
        %760 = vmatprep.subr.mxu0 0.0
        %761 = vmatpush2.msra.mxu0 0.0
        %762 = vmatprep.subr.mxu0 0.0
        %763 = vmatpush2.msra.mxu0 0.0
        %764 = vmatprep.subr.mxu0 0.0
        %765 = vmatpush2.msra.mxu0 0.0
        %766 = vmatprep.subr.mxu0 0.0
        %767 = vmatpush2.msra.mxu0 0.0
        %768 = vmatprep.subr.mxu0 0.0
        %769 = vmatpush2.msra.mxu0 0.0
        %770 = vmatprep.subr.mxu0 0.0
        %771 = vmatpush2.msra.mxu0 0.0
        %772 = vmatprep.subr.mxu0 0.0
        %773 = vmatpush2.msra.mxu0 0.0
        %774 = vmatprep.subr.mxu0 0.0
        %775 = vmatpush2.msra.mxu0 0.0
        %776 = vmatprep.subr.mxu0 0.0
        %777 = vmatpush2.msra.mxu0 0.0
        %778 = vmatprep.subr.mxu0 0.0
        %779 = vmatpush2.msra.mxu0 0.0
        %780 = vmatprep.subr.mxu0 0.0
        %781 = vmatpush2.msra.mxu0 0.0
        %782 = vmatprep.subr.mxu0 0.0
        %783 = vmatpush2.msra.mxu0 0.0
        %784 = vmatprep.subr.mxu0 0.0
        %785 = vmatpush2.msra.mxu0 0.0
        %786 = vmatprep.subr.mxu0 0.0
        %787 = vmatpush2.msra.mxu0 0.0
        %788 = vmatprep.subr.mxu0 0.0
        %789 = vmatpush2.msra.mxu0 0.0
        %790 = vmatprep.subr.mxu0 0.0
        %791 = vmatpush2.msra.mxu0 0.0
        %792 = vmatprep.mubr.f32.mxu0 0.0
        %793 = vmatmul.mubr.f32.gmra.mxu0 %v726
        %v794 = vpop.f32.mrf.mxu0
        %v795 = vadd.f32 0.0, %v794
        %v796 = vpop.f32.mrf.mxu0
        %797 = vdwg.mxu0
        %v798 = vrcp.pop %v720
        %v799 = vmul.f32 %v795, %v798
        %801 = vrot.lane.b32.xlu0 %v799, 4
        %v802 = vpop.permute.xlu0 %801
        %vm804 = vcmask 64544
        %805 = vst.msk [vmem:[#allocation4] sm:$0xff] %vm804, %v802
        %806 = vrot.lane.b32.xlu0 %v468, 120
        %v807 = vpop.permute.xlu0 %806
        %808 = vrot.lane.b32.xlu0 %v469, 120
        %v809 = vpop.permute.xlu0 %808
        %v810 = vsel %vm471, %v807, 0
        %v812 = vsel %vm471, %v809, 0
        %814 = vmatprep.subr.mxu0 0.0
        %815 = vmatpush1.xpose.msra.mxu0 0.0
        %816 = vmatprep.subr.mxu0 0.0
        %817 = vmatpush1.xpose.msra.mxu0 0.0
        %818 = vmatprep.subr.mxu0 0.0
        %819 = vmatpush1.xpose.msra.mxu0 0.0
        %820 = vmatprep.subr.mxu0 0.0
        %821 = vmatpush1.xpose.msra.mxu0 0.0
        %822 = vmatprep.subr.mxu0 0.0
        %823 = vmatpush1.xpose.msra.mxu0 0.0
        %824 = vmatprep.subr.mxu0 0.0
        %825 = vmatpush1.xpose.msra.mxu0 0.0
        %826 = vmatprep.subr.mxu0 0.0
        %827 = vmatpush1.xpose.msra.mxu0 0.0
        %828 = vmatprep.subr.mxu0 0.0
        %829 = vmatpush1.xpose.msra.mxu0 0.0
        %830 = vmatprep.subr.mxu0 0.0
        %831 = vmatpush1.xpose.msra.mxu0 0.0
        %832 = vmatprep.subr.mxu0 0.0
        %833 = vmatpush1.xpose.msra.mxu0 0.0
        %834 = vmatprep.subr.mxu0 0.0
        %835 = vmatpush1.xpose.msra.mxu0 0.0
        %836 = vmatprep.subr.mxu0 0.0
        %837 = vmatpush1.xpose.msra.mxu0 0.0
        %838 = vmatprep.subr.mxu0 0.0
        %839 = vmatpush1.xpose.msra.mxu0 0.0
        %840 = vmatprep.subr.mxu0 0.0
        %841 = vmatpush1.xpose.msra.mxu0 0.0
        %842 = vmatprep.subr.mxu0 0.0
        %843 = vmatpush1.xpose.msra.mxu0 0.0
        %844 = vmatprep.subr.mxu0 0.0
        %845 = vmatpush1.xpose.msra.mxu0 %v812
        %846 = vmatprep.subr.mxu0 0.0
        %847 = vmatpush2.xpose.msra.mxu0 0.0
        %848 = vmatprep.subr.mxu0 0.0
        %849 = vmatpush2.xpose.msra.mxu0 0.0
        %850 = vmatprep.subr.mxu0 0.0
        %851 = vmatpush2.xpose.msra.mxu0 0.0
        %852 = vmatprep.subr.mxu0 0.0
        %853 = vmatpush2.xpose.msra.mxu0 0.0
        %854 = vmatprep.subr.mxu0 0.0
        %855 = vmatpush2.xpose.msra.mxu0 0.0
        %856 = vmatprep.subr.mxu0 0.0
        %857 = vmatpush2.xpose.msra.mxu0 0.0
        %858 = vmatprep.subr.mxu0 0.0
        %859 = vmatpush2.xpose.msra.mxu0 0.0
        %860 = vmatprep.subr.mxu0 0.0
        %861 = vmatpush2.xpose.msra.mxu0 0.0
        %862 = vmatprep.subr.mxu0 0.0
        %863 = vmatpush2.xpose.msra.mxu0 0.0
        %864 = vmatprep.subr.mxu0 0.0
        %865 = vmatpush2.xpose.msra.mxu0 0.0
        %866 = vmatprep.subr.mxu0 0.0
        %867 = vmatpush2.xpose.msra.mxu0 0.0
        %868 = vmatprep.subr.mxu0 0.0
        %869 = vmatpush2.xpose.msra.mxu0 0.0
        %870 = vmatprep.subr.mxu0 0.0
        %871 = vmatpush2.xpose.msra.mxu0 0.0
        %872 = vmatprep.subr.mxu0 0.0
        %873 = vmatpush2.xpose.msra.mxu0 0.0
        %874 = vmatprep.subr.mxu0 0.0
        %875 = vmatpush2.xpose.msra.mxu0 0.0
        %876 = vmatprep.subr.mxu0 0.0
        %877 = vmatpush2.xpose.msra.mxu0 0.0
        %878 = vmatprep.mubr.f32.mxu0 0.0
        %879 = vmatmul.mubr.f32.gmra.mxu0 %v810
        %v880 = vpop.f32.mrf.mxu0
        %v881 = vadd.f32 0.0, %v880
        %v882 = vpop.f32.mrf.mxu0
        %883 = vdwg.mxu0
        %v884 = vsel %vm548, %v881, -inf
        %885 = vmax.xlane.f32.xlu0 %v884
        %v886 = vpop.xlane.xlu0 %885
        %v887 = vsub.f32 %v881, %v886
        %v888 = vmul.f32 %v887, 1.442695
        %v889 = vpow.pop %v888
        %v890 = vsel %vm548, %v889, 0.0
        %891 = vadd.xlane.f32.xlu0 %v890
        %v892 = vpop.xlane.xlu0 %891
        %893 = vrot.lane.b32.xlu0 %v470, 120
        %v894 = vpop.permute.xlu0 %893
        %v897 = vsel %vm548, %v889, 0
        %899 = vmatprep.subr.mxu0 0.0
        %900 = vmatpush1.msra.mxu0 0.0
        %901 = vmatprep.subr.mxu0 0.0
        %902 = vmatpush1.msra.mxu0 0.0
        %903 = vmatprep.subr.mxu0 0.0
        %904 = vmatpush1.msra.mxu0 0.0
        %905 = vmatprep.subr.mxu0 0.0
        %906 = vmatpush1.msra.mxu0 0.0
        %907 = vmatprep.subr.mxu0 0.0
        %908 = vmatpush1.msra.mxu0 0.0
        %909 = vmatprep.subr.mxu0 0.0
        %910 = vmatpush1.msra.mxu0 0.0
        %911 = vmatprep.subr.mxu0 0.0
        %912 = vmatpush1.msra.mxu0 0.0
        %913 = vmatprep.subr.mxu0 0.0
        %914 = vmatpush1.msra.mxu0 0.0
        %915 = vmatprep.subr.mxu0 0.0
        %916 = vmatpush1.msra.mxu0 0.0
        %917 = vmatprep.subr.mxu0 0.0
        %918 = vmatpush1.msra.mxu0 0.0
        %919 = vmatprep.subr.mxu0 0.0
        %920 = vmatpush1.msra.mxu0 0.0
        %921 = vmatprep.subr.mxu0 0.0
        %922 = vmatpush1.msra.mxu0 0.0
        %923 = vmatprep.subr.mxu0 0.0
        %924 = vmatpush1.msra.mxu0 0.0
        %925 = vmatprep.subr.mxu0 0.0
        %926 = vmatpush1.msra.mxu0 0.0
        %927 = vmatprep.subr.mxu0 0.0
        %928 = vmatpush1.msra.mxu0 0.0
        %929 = vmatprep.subr.mxu0 0.0
        %930 = vmatpush1.msra.mxu0 %v894
        %931 = vmatprep.subr.mxu0 0.0
        %932 = vmatpush2.msra.mxu0 0.0
        %933 = vmatprep.subr.mxu0 0.0
        %934 = vmatpush2.msra.mxu0 0.0
        %935 = vmatprep.subr.mxu0 0.0
        %936 = vmatpush2.msra.mxu0 0.0
        %937 = vmatprep.subr.mxu0 0.0
        %938 = vmatpush2.msra.mxu0 0.0
        %939 = vmatprep.subr.mxu0 0.0
        %940 = vmatpush2.msra.mxu0 0.0
        %941 = vmatprep.subr.mxu0 0.0
        %942 = vmatpush2.msra.mxu0 0.0
        %943 = vmatprep.subr.mxu0 0.0
        %944 = vmatpush2.msra.mxu0 0.0
        %945 = vmatprep.subr.mxu0 0.0
        %946 = vmatpush2.msra.mxu0 0.0
        %947 = vmatprep.subr.mxu0 0.0
        %948 = vmatpush2.msra.mxu0 0.0
        %949 = vmatprep.subr.mxu0 0.0
        %950 = vmatpush2.msra.mxu0 0.0
        %951 = vmatprep.subr.mxu0 0.0
        %952 = vmatpush2.msra.mxu0 0.0
        %953 = vmatprep.subr.mxu0 0.0
        %954 = vmatpush2.msra.mxu0 0.0
        %955 = vmatprep.subr.mxu0 0.0
        %956 = vmatpush2.msra.mxu0 0.0
        %957 = vmatprep.subr.mxu0 0.0
        %958 = vmatpush2.msra.mxu0 0.0
        %959 = vmatprep.subr.mxu0 0.0
        %960 = vmatpush2.msra.mxu0 0.0
        %961 = vmatprep.subr.mxu0 0.0
        %962 = vmatpush2.msra.mxu0 0.0
        %963 = vmatprep.mubr.f32.mxu0 0.0
        %964 = vmatmul.mubr.f32.gmra.mxu0 %v897
        %v965 = vpop.f32.mrf.mxu0
        %v966 = vadd.f32 0.0, %v965
        %v967 = vpop.f32.mrf.mxu0
        %968 = vdwg.mxu0
        %v969 = vrcp.pop %v892
        %v970 = vmul.f32 %v966, %v969
        %972 = vrot.lane.b32.xlu0 %v970, 8
        %v973 = vpop.permute.xlu0 %972
        %vm975 = vcmask 97344
        %976 = vst.msk [vmem:[#allocation4] sm:$0xff] %vm975, %v973
        %977 = vrot.lane.b32.xlu0 %v468, 116
        %v978 = vpop.permute.xlu0 %977
        %979 = vrot.lane.b32.xlu0 %v469, 116
        %v980 = vpop.permute.xlu0 %979
        %v981 = vsel %vm471, %v978, 0
        %v983 = vsel %vm471, %v980, 0
        %985 = vmatprep.subr.mxu0 0.0
        %986 = vmatpush1.xpose.msra.mxu0 0.0
        %987 = vmatprep.subr.mxu0 0.0
        %988 = vmatpush1.xpose.msra.mxu0 0.0
        %989 = vmatprep.subr.mxu0 0.0
        %990 = vmatpush1.xpose.msra.mxu0 0.0
        %991 = vmatprep.subr.mxu0 0.0
        %992 = vmatpush1.xpose.msra.mxu0 0.0
        %993 = vmatprep.subr.mxu0 0.0
        %994 = vmatpush1.xpose.msra.mxu0 0.0
        %995 = vmatprep.subr.mxu0 0.0
        %996 = vmatpush1.xpose.msra.mxu0 0.0
        %997 = vmatprep.subr.mxu0 0.0
        %998 = vmatpush1.xpose.msra.mxu0 0.0
        %999 = vmatprep.subr.mxu0 0.0
        %1000 = vmatpush1.xpose.msra.mxu0 0.0
        %1001 = vmatprep.subr.mxu0 0.0
        %1002 = vmatpush1.xpose.msra.mxu0 0.0
        %1003 = vmatprep.subr.mxu0 0.0
        %1004 = vmatpush1.xpose.msra.mxu0 0.0
        %1005 = vmatprep.subr.mxu0 0.0
        %1006 = vmatpush1.xpose.msra.mxu0 0.0
        %1007 = vmatprep.subr.mxu0 0.0
        %1008 = vmatpush1.xpose.msra.mxu0 0.0
        %1009 = vmatprep.subr.mxu0 0.0
        %1010 = vmatpush1.xpose.msra.mxu0 0.0
        %1011 = vmatprep.subr.mxu0 0.0
        %1012 = vmatpush1.xpose.msra.mxu0 0.0
        %1013 = vmatprep.subr.mxu0 0.0
        %1014 = vmatpush1.xpose.msra.mxu0 0.0
        %1015 = vmatprep.subr.mxu0 0.0
        %1016 = vmatpush1.xpose.msra.mxu0 %v983
        %1017 = vmatprep.subr.mxu0 0.0
        %1018 = vmatpush2.xpose.msra.mxu0 0.0
        %1019 = vmatprep.subr.mxu0 0.0
        %1020 = vmatpush2.xpose.msra.mxu0 0.0
        %1021 = vmatprep.subr.mxu0 0.0
        %1022 = vmatpush2.xpose.msra.mxu0 0.0
        %1023 = vmatprep.subr.mxu0 0.0
        %1024 = vmatpush2.xpose.msra.mxu0 0.0
        %1025 = vmatprep.subr.mxu0 0.0
        %1026 = vmatpush2.xpose.msra.mxu0 0.0
        %1027 = vmatprep.subr.mxu0 0.0
        %1028 = vmatpush2.xpose.msra.mxu0 0.0
        %1029 = vmatprep.subr.mxu0 0.0
        %1030 = vmatpush2.xpose.msra.mxu0 0.0
        %1031 = vmatprep.subr.mxu0 0.0
        %1032 = vmatpush2.xpose.msra.mxu0 0.0
        %1033 = vmatprep.subr.mxu0 0.0
        %1034 = vmatpush2.xpose.msra.mxu0 0.0
        %1035 = vmatprep.subr.mxu0 0.0
        %1036 = vmatpush2.xpose.msra.mxu0 0.0
        %1037 = vmatprep.subr.mxu0 0.0
        %1038 = vmatpush2.xpose.msra.mxu0 0.0
        %1039 = vmatprep.subr.mxu0 0.0
        %1040 = vmatpush2.xpose.msra.mxu0 0.0
        %1041 = vmatprep.subr.mxu0 0.0
        %1042 = vmatpush2.xpose.msra.mxu0 0.0
        %1043 = vmatprep.subr.mxu0 0.0
        %1044 = vmatpush2.xpose.msra.mxu0 0.0
        %1045 = vmatprep.subr.mxu0 0.0
        %1046 = vmatpush2.xpose.msra.mxu0 0.0
        %1047 = vmatprep.subr.mxu0 0.0
        %1048 = vmatpush2.xpose.msra.mxu0 0.0
        %1049 = vmatprep.mubr.f32.mxu0 0.0
        %1050 = vmatmul.mubr.f32.gmra.mxu0 %v981
        %v1051 = vpop.f32.mrf.mxu0
        %v1052 = vadd.f32 0.0, %v1051
        %v1053 = vpop.f32.mrf.mxu0
        %1054 = vdwg.mxu0
        %v1055 = vsel %vm548, %v1052, -inf
        %1056 = vmax.xlane.f32.xlu0 %v1055
        %v1057 = vpop.xlane.xlu0 %1056
        %v1058 = vsub.f32 %v1052, %v1057
        %v1059 = vmul.f32 %v1058, 1.442695
        %v1060 = vpow.pop %v1059
        %v1061 = vsel %vm548, %v1060, 0.0
        %1062 = vadd.xlane.f32.xlu0 %v1061
        %v1063 = vpop.xlane.xlu0 %1062
        %1064 = vrot.lane.b32.xlu0 %v470, 116
        %v1065 = vpop.permute.xlu0 %1064
        %v1068 = vsel %vm548, %v1060, 0
        %1070 = vmatprep.subr.mxu0 0.0
        %1071 = vmatpush1.msra.mxu0 0.0
        %1072 = vmatprep.subr.mxu0 0.0
        %1073 = vmatpush1.msra.mxu0 0.0
        %1074 = vmatprep.subr.mxu0 0.0
        %1075 = vmatpush1.msra.mxu0 0.0
        %1076 = vmatprep.subr.mxu0 0.0
        %1077 = vmatpush1.msra.mxu0 0.0
        %1078 = vmatprep.subr.mxu0 0.0
        %1079 = vmatpush1.msra.mxu0 0.0
        %1080 = vmatprep.subr.mxu0 0.0
        %1081 = vmatpush1.msra.mxu0 0.0
        %1082 = vmatprep.subr.mxu0 0.0
        %1083 = vmatpush1.msra.mxu0 0.0
        %1084 = vmatprep.subr.mxu0 0.0
        %1085 = vmatpush1.msra.mxu0 0.0
        %1086 = vmatprep.subr.mxu0 0.0
        %1087 = vmatpush1.msra.mxu0 0.0
        %1088 = vmatprep.subr.mxu0 0.0
        %1089 = vmatpush1.msra.mxu0 0.0
        %1090 = vmatprep.subr.mxu0 0.0
        %1091 = vmatpush1.msra.mxu0 0.0
        %1092 = vmatprep.subr.mxu0 0.0
        %1093 = vmatpush1.msra.mxu0 0.0
        %1094 = vmatprep.subr.mxu0 0.0
        %1095 = vmatpush1.msra.mxu0 0.0
        %1096 = vmatprep.subr.mxu0 0.0
        %1097 = vmatpush1.msra.mxu0 0.0
        %1098 = vmatprep.subr.mxu0 0.0
        %1099 = vmatpush1.msra.mxu0 0.0
        %1100 = vmatprep.subr.mxu0 0.0
        %1101 = vmatpush1.msra.mxu0 %v1065
        %1102 = vmatprep.subr.mxu0 0.0
        %1103 = vmatpush2.msra.mxu0 0.0
        %1104 = vmatprep.subr.mxu0 0.0
        %1105 = vmatpush2.msra.mxu0 0.0
        %1106 = vmatprep.subr.mxu0 0.0
        %1107 = vmatpush2.msra.mxu0 0.0
        %1108 = vmatprep.subr.mxu0 0.0
        %1109 = vmatpush2.msra.mxu0 0.0
        %1110 = vmatprep.subr.mxu0 0.0
        %1111 = vmatpush2.msra.mxu0 0.0
        %1112 = vmatprep.subr.mxu0 0.0
        %1113 = vmatpush2.msra.mxu0 0.0
        %1114 = vmatprep.subr.mxu0 0.0
        %1115 = vmatpush2.msra.mxu0 0.0
        %1116 = vmatprep.subr.mxu0 0.0
        %1117 = vmatpush2.msra.mxu0 0.0
        %1118 = vmatprep.subr.mxu0 0.0
        %1119 = vmatpush2.msra.mxu0 0.0
        %1120 = vmatprep.subr.mxu0 0.0
        %1121 = vmatpush2.msra.mxu0 0.0
        %1122 = vmatprep.subr.mxu0 0.0
        %1123 = vmatpush2.msra.mxu0 0.0
        %1124 = vmatprep.subr.mxu0 0.0
        %1125 = vmatpush2.msra.mxu0 0.0
        %1126 = vmatprep.subr.mxu0 0.0
        %1127 = vmatpush2.msra.mxu0 0.0
        %1128 = vmatprep.subr.mxu0 0.0
        %1129 = vmatpush2.msra.mxu0 0.0
        %1130 = vmatprep.subr.mxu0 0.0
        %1131 = vmatpush2.msra.mxu0 0.0
        %1132 = vmatprep.subr.mxu0 0.0
        %1133 = vmatpush2.msra.mxu0 0.0
        %1134 = vmatprep.mubr.f32.mxu0 0.0
        %1135 = vmatmul.mubr.f32.gmra.mxu0 %v1068
        %v1136 = vpop.f32.mrf.mxu0
        %v1137 = vadd.f32 0.0, %v1136
        %v1138 = vpop.f32.mrf.mxu0
        %1139 = vdwg.mxu0
        %v1140 = vrcp.pop %v1063
        %v1141 = vmul.f32 %v1137, %v1140
        %1143 = vrot.lane.b32.xlu0 %v1141, 12
        %v1144 = vpop.permute.xlu0 %1143
        %vm1146 = vcmask 130144
        %1147 = vst.msk [vmem:[#allocation4] sm:$0xff] %vm1146, %v1144
        %1148 = vrot.lane.b32.xlu0 %v468, 112
        %v1149 = vpop.permute.xlu0 %1148
        %1150 = vrot.lane.b32.xlu0 %v469, 112
        %v1151 = vpop.permute.xlu0 %1150
        %v1152 = vsel %vm471, %v1149, 0
        %v1154 = vsel %vm471, %v1151, 0
        %1156 = vmatprep.subr.mxu0 0.0
        %1157 = vmatpush1.xpose.msra.mxu0 0.0
        %1158 = vmatprep.subr.mxu0 0.0
        %1159 = vmatpush1.xpose.msra.mxu0 0.0
        %1160 = vmatprep.subr.mxu0 0.0
        %1161 = vmatpush1.xpose.msra.mxu0 0.0
        %1162 = vmatprep.subr.mxu0 0.0
        %1163 = vmatpush1.xpose.msra.mxu0 0.0
        %1164 = vmatprep.subr.mxu0 0.0
        %1165 = vmatpush1.xpose.msra.mxu0 0.0
        %1166 = vmatprep.subr.mxu0 0.0
        %1167 = vmatpush1.xpose.msra.mxu0 0.0
        %1168 = vmatprep.subr.mxu0 0.0
        %1169 = vmatpush1.xpose.msra.mxu0 0.0
        %1170 = vmatprep.subr.mxu0 0.0
        %1171 = vmatpush1.xpose.msra.mxu0 0.0
        %1172 = vmatprep.subr.mxu0 0.0
        %1173 = vmatpush1.xpose.msra.mxu0 0.0
        %1174 = vmatprep.subr.mxu0 0.0
        %1175 = vmatpush1.xpose.msra.mxu0 0.0
        %1176 = vmatprep.subr.mxu0 0.0
        %1177 = vmatpush1.xpose.msra.mxu0 0.0
        %1178 = vmatprep.subr.mxu0 0.0
        %1179 = vmatpush1.xpose.msra.mxu0 0.0
        %1180 = vmatprep.subr.mxu0 0.0
        %1181 = vmatpush1.xpose.msra.mxu0 0.0
        %1182 = vmatprep.subr.mxu0 0.0
        %1183 = vmatpush1.xpose.msra.mxu0 0.0
        %1184 = vmatprep.subr.mxu0 0.0
        %1185 = vmatpush1.xpose.msra.mxu0 0.0
        %1186 = vmatprep.subr.mxu0 0.0
        %1187 = vmatpush1.xpose.msra.mxu0 %v1154
        %1188 = vmatprep.subr.mxu0 0.0
        %1189 = vmatpush2.xpose.msra.mxu0 0.0
        %1190 = vmatprep.subr.mxu0 0.0
        %1191 = vmatpush2.xpose.msra.mxu0 0.0
        %1192 = vmatprep.subr.mxu0 0.0
        %1193 = vmatpush2.xpose.msra.mxu0 0.0
        %1194 = vmatprep.subr.mxu0 0.0
        %1195 = vmatpush2.xpose.msra.mxu0 0.0
        %1196 = vmatprep.subr.mxu0 0.0
        %1197 = vmatpush2.xpose.msra.mxu0 0.0
        %1198 = vmatprep.subr.mxu0 0.0
        %1199 = vmatpush2.xpose.msra.mxu0 0.0
        %1200 = vmatprep.subr.mxu0 0.0
        %1201 = vmatpush2.xpose.msra.mxu0 0.0
        %1202 = vmatprep.subr.mxu0 0.0
        %1203 = vmatpush2.xpose.msra.mxu0 0.0
        %1204 = vmatprep.subr.mxu0 0.0
        %1205 = vmatpush2.xpose.msra.mxu0 0.0
        %1206 = vmatprep.subr.mxu0 0.0
        %1207 = vmatpush2.xpose.msra.mxu0 0.0
        %1208 = vmatprep.subr.mxu0 0.0
        %1209 = vmatpush2.xpose.msra.mxu0 0.0
        %1210 = vmatprep.subr.mxu0 0.0
        %1211 = vmatpush2.xpose.msra.mxu0 0.0
        %1212 = vmatprep.subr.mxu0 0.0
        %1213 = vmatpush2.xpose.msra.mxu0 0.0
        %1214 = vmatprep.subr.mxu0 0.0
        %1215 = vmatpush2.xpose.msra.mxu0 0.0
        %1216 = vmatprep.subr.mxu0 0.0
        %1217 = vmatpush2.xpose.msra.mxu0 0.0
        %1218 = vmatprep.subr.mxu0 0.0
        %1219 = vmatpush2.xpose.msra.mxu0 0.0
        %1220 = vmatprep.mubr.f32.mxu0 0.0
        %1221 = vmatmul.mubr.f32.gmra.mxu0 %v1152
        %v1222 = vpop.f32.mrf.mxu0
        %v1223 = vadd.f32 0.0, %v1222
        %v1224 = vpop.f32.mrf.mxu0
        %1225 = vdwg.mxu0
        %v1226 = vsel %vm548, %v1223, -inf
        %1227 = vmax.xlane.f32.xlu0 %v1226
        %v1228 = vpop.xlane.xlu0 %1227
        %v1229 = vsub.f32 %v1223, %v1228
        %v1230 = vmul.f32 %v1229, 1.442695
        %v1231 = vpow.pop %v1230
        %v1232 = vsel %vm548, %v1231, 0.0
        %1233 = vadd.xlane.f32.xlu0 %v1232
        %v1234 = vpop.xlane.xlu0 %1233
        %1235 = vrot.lane.b32.xlu0 %v470, 112
        %v1236 = vpop.permute.xlu0 %1235
        %v1239 = vsel %vm548, %v1231, 0
        %1241 = vmatprep.subr.mxu0 0.0
        %1242 = vmatpush1.msra.mxu0 0.0
        %1243 = vmatprep.subr.mxu0 0.0
        %1244 = vmatpush1.msra.mxu0 0.0
        %1245 = vmatprep.subr.mxu0 0.0
        %1246 = vmatpush1.msra.mxu0 0.0
        %1247 = vmatprep.subr.mxu0 0.0
        %1248 = vmatpush1.msra.mxu0 0.0
        %1249 = vmatprep.subr.mxu0 0.0
        %1250 = vmatpush1.msra.mxu0 0.0
        %1251 = vmatprep.subr.mxu0 0.0
        %1252 = vmatpush1.msra.mxu0 0.0
        %1253 = vmatprep.subr.mxu0 0.0
        %1254 = vmatpush1.msra.mxu0 0.0
        %1255 = vmatprep.subr.mxu0 0.0
        %1256 = vmatpush1.msra.mxu0 0.0
        %1257 = vmatprep.subr.mxu0 0.0
        %1258 = vmatpush1.msra.mxu0 0.0
        %1259 = vmatprep.subr.mxu0 0.0
        %1260 = vmatpush1.msra.mxu0 0.0
        %1261 = vmatprep.subr.mxu0 0.0
        %1262 = vmatpush1.msra.mxu0 0.0
        %1263 = vmatprep.subr.mxu0 0.0
        %1264 = vmatpush1.msra.mxu0 0.0
        %1265 = vmatprep.subr.mxu0 0.0
        %1266 = vmatpush1.msra.mxu0 0.0
        %1267 = vmatprep.subr.mxu0 0.0
        %1268 = vmatpush1.msra.mxu0 0.0
        %1269 = vmatprep.subr.mxu0 0.0
        %1270 = vmatpush1.msra.mxu0 0.0
        %1271 = vmatprep.subr.mxu0 0.0
        %1272 = vmatpush1.msra.mxu0 %v1236
        %1273 = vmatprep.subr.mxu0 0.0
        %1274 = vmatpush2.msra.mxu0 0.0
        %1275 = vmatprep.subr.mxu0 0.0
        %1276 = vmatpush2.msra.mxu0 0.0
        %1277 = vmatprep.subr.mxu0 0.0
        %1278 = vmatpush2.msra.mxu0 0.0
        %1279 = vmatprep.subr.mxu0 0.0
        %1280 = vmatpush2.msra.mxu0 0.0
        %1281 = vmatprep.subr.mxu0 0.0
        %1282 = vmatpush2.msra.mxu0 0.0
        %1283 = vmatprep.subr.mxu0 0.0
        %1284 = vmatpush2.msra.mxu0 0.0
        %1285 = vmatprep.subr.mxu0 0.0
        %1286 = vmatpush2.msra.mxu0 0.0
        %1287 = vmatprep.subr.mxu0 0.0
        %1288 = vmatpush2.msra.mxu0 0.0
        %1289 = vmatprep.subr.mxu0 0.0
        %1290 = vmatpush2.msra.mxu0 0.0
        %1291 = vmatprep.subr.mxu0 0.0
        %1292 = vmatpush2.msra.mxu0 0.0
        %1293 = vmatprep.subr.mxu0 0.0
        %1294 = vmatpush2.msra.mxu0 0.0
        %1295 = vmatprep.subr.mxu0 0.0
        %1296 = vmatpush2.msra.mxu0 0.0
        %1297 = vmatprep.subr.mxu0 0.0
        %1298 = vmatpush2.msra.mxu0 0.0
        %1299 = vmatprep.subr.mxu0 0.0
        %1300 = vmatpush2.msra.mxu0 0.0
        %1301 = vmatprep.subr.mxu0 0.0
        %1302 = vmatpush2.msra.mxu0 0.0
        %1303 = vmatprep.subr.mxu0 0.0
        %1304 = vmatpush2.msra.mxu0 0.0
        %1305 = vmatprep.mubr.f32.mxu0 0.0
        %1306 = vmatmul.mubr.f32.gmra.mxu0 %v1239
        %v1307 = vpop.f32.mrf.mxu0
        %v1308 = vadd.f32 0.0, %v1307
        %v1309 = vpop.f32.mrf.mxu0
        %1310 = vdwg.mxu0
        %v1311 = vrcp.pop %v1234
        %v1312 = vmul.f32 %v1308, %v1311
        %1314 = vrot.lane.b32.xlu0 %v1312, 16
        %v1315 = vpop.permute.xlu0 %1314
        %vm1317 = vcmask 162944
        %1318 = vst.msk [vmem:[#allocation4] sm:$0xff] %vm1317, %v1315
        %1319 = vrot.lane.b32.xlu0 %v468, 108
        %v1320 = vpop.permute.xlu0 %1319
        %1321 = vrot.lane.b32.xlu0 %v469, 108
        %v1322 = vpop.permute.xlu0 %1321
        %v1323 = vsel %vm471, %v1320, 0
        %v1325 = vsel %vm471, %v1322, 0
        %1327 = vmatprep.subr.mxu0 0.0
        %1328 = vmatpush1.xpose.msra.mxu0 0.0
        %1329 = vmatprep.subr.mxu0 0.0
        %1330 = vmatpush1.xpose.msra.mxu0 0.0
        %1331 = vmatprep.subr.mxu0 0.0
        %1332 = vmatpush1.xpose.msra.mxu0 0.0
        %1333 = vmatprep.subr.mxu0 0.0
        %1334 = vmatpush1.xpose.msra.mxu0 0.0
        %1335 = vmatprep.subr.mxu0 0.0
        %1336 = vmatpush1.xpose.msra.mxu0 0.0
        %1337 = vmatprep.subr.mxu0 0.0
        %1338 = vmatpush1.xpose.msra.mxu0 0.0
        %1339 = vmatprep.subr.mxu0 0.0
        %1340 = vmatpush1.xpose.msra.mxu0 0.0
        %1341 = vmatprep.subr.mxu0 0.0
        %1342 = vmatpush1.xpose.msra.mxu0 0.0
        %1343 = vmatprep.subr.mxu0 0.0
        %1344 = vmatpush1.xpose.msra.mxu0 0.0
        %1345 = vmatprep.subr.mxu0 0.0
        %1346 = vmatpush1.xpose.msra.mxu0 0.0
        %1347 = vmatprep.subr.mxu0 0.0
        %1348 = vmatpush1.xpose.msra.mxu0 0.0
        %1349 = vmatprep.subr.mxu0 0.0
        %1350 = vmatpush1.xpose.msra.mxu0 0.0
        %1351 = vmatprep.subr.mxu0 0.0
        %1352 = vmatpush1.xpose.msra.mxu0 0.0
        %1353 = vmatprep.subr.mxu0 0.0
        %1354 = vmatpush1.xpose.msra.mxu0 0.0
        %1355 = vmatprep.subr.mxu0 0.0
        %1356 = vmatpush1.xpose.msra.mxu0 0.0
        %1357 = vmatprep.subr.mxu0 0.0
        %1358 = vmatpush1.xpose.msra.mxu0 %v1325
        %1359 = vmatprep.subr.mxu0 0.0
        %1360 = vmatpush2.xpose.msra.mxu0 0.0
        %1361 = vmatprep.subr.mxu0 0.0
        %1362 = vmatpush2.xpose.msra.mxu0 0.0
        %1363 = vmatprep.subr.mxu0 0.0
        %1364 = vmatpush2.xpose.msra.mxu0 0.0
        %1365 = vmatprep.subr.mxu0 0.0
        %1366 = vmatpush2.xpose.msra.mxu0 0.0
        %1367 = vmatprep.subr.mxu0 0.0
        %1368 = vmatpush2.xpose.msra.mxu0 0.0
        %1369 = vmatprep.subr.mxu0 0.0
        %1370 = vmatpush2.xpose.msra.mxu0 0.0
        %1371 = vmatprep.subr.mxu0 0.0
        %1372 = vmatpush2.xpose.msra.mxu0 0.0
        %1373 = vmatprep.subr.mxu0 0.0
        %1374 = vmatpush2.xpose.msra.mxu0 0.0
        %1375 = vmatprep.subr.mxu0 0.0
        %1376 = vmatpush2.xpose.msra.mxu0 0.0
        %1377 = vmatprep.subr.mxu0 0.0
        %1378 = vmatpush2.xpose.msra.mxu0 0.0
        %1379 = vmatprep.subr.mxu0 0.0
        %1380 = vmatpush2.xpose.msra.mxu0 0.0
        %1381 = vmatprep.subr.mxu0 0.0
        %1382 = vmatpush2.xpose.msra.mxu0 0.0
        %1383 = vmatprep.subr.mxu0 0.0
        %1384 = vmatpush2.xpose.msra.mxu0 0.0
        %1385 = vmatprep.subr.mxu0 0.0
        %1386 = vmatpush2.xpose.msra.mxu0 0.0
        %1387 = vmatprep.subr.mxu0 0.0
        %1388 = vmatpush2.xpose.msra.mxu0 0.0
        %1389 = vmatprep.subr.mxu0 0.0
        %1390 = vmatpush2.xpose.msra.mxu0 0.0
        %1391 = vmatprep.mubr.f32.mxu0 0.0
        %1392 = vmatmul.mubr.f32.gmra.mxu0 %v1323
        %v1393 = vpop.f32.mrf.mxu0
        %v1394 = vadd.f32 0.0, %v1393
        %v1395 = vpop.f32.mrf.mxu0
        %1396 = vdwg.mxu0
        %v1397 = vsel %vm548, %v1394, -inf
        %1398 = vmax.xlane.f32.xlu0 %v1397
        %v1399 = vpop.xlane.xlu0 %1398
        %v1400 = vsub.f32 %v1394, %v1399
        %v1401 = vmul.f32 %v1400, 1.442695
        %v1402 = vpow.pop %v1401
        %v1403 = vsel %vm548, %v1402, 0.0
        %1404 = vadd.xlane.f32.xlu0 %v1403
        %v1405 = vpop.xlane.xlu0 %1404
        %1406 = vrot.lane.b32.xlu0 %v470, 108
        %v1407 = vpop.permute.xlu0 %1406
        %v1410 = vsel %vm548, %v1402, 0
        %1412 = vmatprep.subr.mxu0 0.0
        %1413 = vmatpush1.msra.mxu0 0.0
        %1414 = vmatprep.subr.mxu0 0.0
        %1415 = vmatpush1.msra.mxu0 0.0
        %1416 = vmatprep.subr.mxu0 0.0
        %1417 = vmatpush1.msra.mxu0 0.0
        %1418 = vmatprep.subr.mxu0 0.0
        %1419 = vmatpush1.msra.mxu0 0.0
        %1420 = vmatprep.subr.mxu0 0.0
        %1421 = vmatpush1.msra.mxu0 0.0
        %1422 = vmatprep.subr.mxu0 0.0
        %1423 = vmatpush1.msra.mxu0 0.0
        %1424 = vmatprep.subr.mxu0 0.0
        %1425 = vmatpush1.msra.mxu0 0.0
        %1426 = vmatprep.subr.mxu0 0.0
        %1427 = vmatpush1.msra.mxu0 0.0
        %1428 = vmatprep.subr.mxu0 0.0
        %1429 = vmatpush1.msra.mxu0 0.0
        %1430 = vmatprep.subr.mxu0 0.0
        %1431 = vmatpush1.msra.mxu0 0.0
        %1432 = vmatprep.subr.mxu0 0.0
        %1433 = vmatpush1.msra.mxu0 0.0
        %1434 = vmatprep.subr.mxu0 0.0
        %1435 = vmatpush1.msra.mxu0 0.0
        %1436 = vmatprep.subr.mxu0 0.0
        %1437 = vmatpush1.msra.mxu0 0.0
        %1438 = vmatprep.subr.mxu0 0.0
        %1439 = vmatpush1.msra.mxu0 0.0
        %1440 = vmatprep.subr.mxu0 0.0
        %1441 = vmatpush1.msra.mxu0 0.0
        %1442 = vmatprep.subr.mxu0 0.0
        %1443 = vmatpush1.msra.mxu0 %v1407
        %1444 = vmatprep.subr.mxu0 0.0
        %1445 = vmatpush2.msra.mxu0 0.0
        %1446 = vmatprep.subr.mxu0 0.0
        %1447 = vmatpush2.msra.mxu0 0.0
        %1448 = vmatprep.subr.mxu0 0.0
        %1449 = vmatpush2.msra.mxu0 0.0
        %1450 = vmatprep.subr.mxu0 0.0
        %1451 = vmatpush2.msra.mxu0 0.0
        %1452 = vmatprep.subr.mxu0 0.0
        %1453 = vmatpush2.msra.mxu0 0.0
        %1454 = vmatprep.subr.mxu0 0.0
        %1455 = vmatpush2.msra.mxu0 0.0
        %1456 = vmatprep.subr.mxu0 0.0
        %1457 = vmatpush2.msra.mxu0 0.0
        %1458 = vmatprep.subr.mxu0 0.0
        %1459 = vmatpush2.msra.mxu0 0.0
        %1460 = vmatprep.subr.mxu0 0.0
        %1461 = vmatpush2.msra.mxu0 0.0
        %1462 = vmatprep.subr.mxu0 0.0
        %1463 = vmatpush2.msra.mxu0 0.0
        %1464 = vmatprep.subr.mxu0 0.0
        %1465 = vmatpush2.msra.mxu0 0.0
        %1466 = vmatprep.subr.mxu0 0.0
        %1467 = vmatpush2.msra.mxu0 0.0
        %1468 = vmatprep.subr.mxu0 0.0
        %1469 = vmatpush2.msra.mxu0 0.0
        %1470 = vmatprep.subr.mxu0 0.0
        %1471 = vmatpush2.msra.mxu0 0.0
        %1472 = vmatprep.subr.mxu0 0.0
        %1473 = vmatpush2.msra.mxu0 0.0
        %1474 = vmatprep.subr.mxu0 0.0
        %1475 = vmatpush2.msra.mxu0 0.0
        %1476 = vmatprep.mubr.f32.mxu0 0.0
        %1477 = vmatmul.mubr.f32.gmra.mxu0 %v1410
        %v1478 = vpop.f32.mrf.mxu0
        %v1479 = vadd.f32 0.0, %v1478
        %v1480 = vpop.f32.mrf.mxu0
        %1481 = vdwg.mxu0
        %v1482 = vrcp.pop %v1405
        %v1483 = vmul.f32 %v1479, %v1482
        %1485 = vrot.lane.b32.xlu0 %v1483, 20
        %v1486 = vpop.permute.xlu0 %1485
        %vm1488 = vcmask 195744
        %1489 = vst.msk [vmem:[#allocation4] sm:$0xff] %vm1488, %v1486
        %1490 = vrot.lane.b32.xlu0 %v468, 104
        %v1491 = vpop.permute.xlu0 %1490
        %1492 = vrot.lane.b32.xlu0 %v469, 104
        %v1493 = vpop.permute.xlu0 %1492
        %v1494 = vsel %vm471, %v1491, 0
        %v1496 = vsel %vm471, %v1493, 0
        %1498 = vmatprep.subr.mxu0 0.0
        %1499 = vmatpush1.xpose.msra.mxu0 0.0
        %1500 = vmatprep.subr.mxu0 0.0
        %1501 = vmatpush1.xpose.msra.mxu0 0.0
        %1502 = vmatprep.subr.mxu0 0.0
        %1503 = vmatpush1.xpose.msra.mxu0 0.0
        %1504 = vmatprep.subr.mxu0 0.0
        %1505 = vmatpush1.xpose.msra.mxu0 0.0
        %1506 = vmatprep.subr.mxu0 0.0
        %1507 = vmatpush1.xpose.msra.mxu0 0.0
        %1508 = vmatprep.subr.mxu0 0.0
        %1509 = vmatpush1.xpose.msra.mxu0 0.0
        %1510 = vmatprep.subr.mxu0 0.0
        %1511 = vmatpush1.xpose.msra.mxu0 0.0
        %1512 = vmatprep.subr.mxu0 0.0
        %1513 = vmatpush1.xpose.msra.mxu0 0.0
        %1514 = vmatprep.subr.mxu0 0.0
        %1515 = vmatpush1.xpose.msra.mxu0 0.0
        %1516 = vmatprep.subr.mxu0 0.0
        %1517 = vmatpush1.xpose.msra.mxu0 0.0
        %1518 = vmatprep.subr.mxu0 0.0
        %1519 = vmatpush1.xpose.msra.mxu0 0.0
        %1520 = vmatprep.subr.mxu0 0.0
        %1521 = vmatpush1.xpose.msra.mxu0 0.0
        %1522 = vmatprep.subr.mxu0 0.0
        %1523 = vmatpush1.xpose.msra.mxu0 0.0
        %1524 = vmatprep.subr.mxu0 0.0
        %1525 = vmatpush1.xpose.msra.mxu0 0.0
        %1526 = vmatprep.subr.mxu0 0.0
        %1527 = vmatpush1.xpose.msra.mxu0 0.0
        %1528 = vmatprep.subr.mxu0 0.0
        %1529 = vmatpush1.xpose.msra.mxu0 %v1496
        %1530 = vmatprep.subr.mxu0 0.0
        %1531 = vmatpush2.xpose.msra.mxu0 0.0
        %1532 = vmatprep.subr.mxu0 0.0
        %1533 = vmatpush2.xpose.msra.mxu0 0.0
        %1534 = vmatprep.subr.mxu0 0.0
        %1535 = vmatpush2.xpose.msra.mxu0 0.0
        %1536 = vmatprep.subr.mxu0 0.0
        %1537 = vmatpush2.xpose.msra.mxu0 0.0
        %1538 = vmatprep.subr.mxu0 0.0
        %1539 = vmatpush2.xpose.msra.mxu0 0.0
        %1540 = vmatprep.subr.mxu0 0.0
        %1541 = vmatpush2.xpose.msra.mxu0 0.0
        %1542 = vmatprep.subr.mxu0 0.0
        %1543 = vmatpush2.xpose.msra.mxu0 0.0
        %1544 = vmatprep.subr.mxu0 0.0
        %1545 = vmatpush2.xpose.msra.mxu0 0.0
        %1546 = vmatprep.subr.mxu0 0.0
        %1547 = vmatpush2.xpose.msra.mxu0 0.0
        %1548 = vmatprep.subr.mxu0 0.0
        %1549 = vmatpush2.xpose.msra.mxu0 0.0
        %1550 = vmatprep.subr.mxu0 0.0
        %1551 = vmatpush2.xpose.msra.mxu0 0.0
        %1552 = vmatprep.subr.mxu0 0.0
        %1553 = vmatpush2.xpose.msra.mxu0 0.0
        %1554 = vmatprep.subr.mxu0 0.0
        %1555 = vmatpush2.xpose.msra.mxu0 0.0
        %1556 = vmatprep.subr.mxu0 0.0
        %1557 = vmatpush2.xpose.msra.mxu0 0.0
        %1558 = vmatprep.subr.mxu0 0.0
        %1559 = vmatpush2.xpose.msra.mxu0 0.0
        %1560 = vmatprep.subr.mxu0 0.0
        %1561 = vmatpush2.xpose.msra.mxu0 0.0
        %1562 = vmatprep.mubr.f32.mxu0 0.0
        %1563 = vmatmul.mubr.f32.gmra.mxu0 %v1494
        %v1564 = vpop.f32.mrf.mxu0
        %v1565 = vadd.f32 0.0, %v1564
        %v1566 = vpop.f32.mrf.mxu0
        %1567 = vdwg.mxu0
        %v1568 = vsel %vm548, %v1565, -inf
        %1569 = vmax.xlane.f32.xlu0 %v1568
        %v1570 = vpop.xlane.xlu0 %1569
        %v1571 = vsub.f32 %v1565, %v1570
        %v1572 = vmul.f32 %v1571, 1.442695
        %v1573 = vpow.pop %v1572
        %v1574 = vsel %vm548, %v1573, 0.0
        %1575 = vadd.xlane.f32.xlu0 %v1574
        %v1576 = vpop.xlane.xlu0 %1575
        %1577 = vrot.lane.b32.xlu0 %v470, 104
        %v1578 = vpop.permute.xlu0 %1577
        %v1581 = vsel %vm548, %v1573, 0
        %1583 = vmatprep.subr.mxu0 0.0
        %1584 = vmatpush1.msra.mxu0 0.0
        %1585 = vmatprep.subr.mxu0 0.0
        %1586 = vmatpush1.msra.mxu0 0.0
        %1587 = vmatprep.subr.mxu0 0.0
        %1588 = vmatpush1.msra.mxu0 0.0
        %1589 = vmatprep.subr.mxu0 0.0
        %1590 = vmatpush1.msra.mxu0 0.0
        %1591 = vmatprep.subr.mxu0 0.0
        %1592 = vmatpush1.msra.mxu0 0.0
        %1593 = vmatprep.subr.mxu0 0.0
        %1594 = vmatpush1.msra.mxu0 0.0
        %1595 = vmatprep.subr.mxu0 0.0
        %1596 = vmatpush1.msra.mxu0 0.0
        %1597 = vmatprep.subr.mxu0 0.0
        %1598 = vmatpush1.msra.mxu0 0.0
        %1599 = vmatprep.subr.mxu0 0.0
        %1600 = vmatpush1.msra.mxu0 0.0
        %1601 = vmatprep.subr.mxu0 0.0
        %1602 = vmatpush1.msra.mxu0 0.0
        %1603 = vmatprep.subr.mxu0 0.0
        %1604 = vmatpush1.msra.mxu0 0.0
        %1605 = vmatprep.subr.mxu0 0.0
        %1606 = vmatpush1.msra.mxu0 0.0
        %1607 = vmatprep.subr.mxu0 0.0
        %1608 = vmatpush1.msra.mxu0 0.0
        %1609 = vmatprep.subr.mxu0 0.0
        %1610 = vmatpush1.msra.mxu0 0.0
        %1611 = vmatprep.subr.mxu0 0.0
        %1612 = vmatpush1.msra.mxu0 0.0
        %1613 = vmatprep.subr.mxu0 0.0
        %1614 = vmatpush1.msra.mxu0 %v1578
        %1615 = vmatprep.subr.mxu0 0.0
        %1616 = vmatpush2.msra.mxu0 0.0
        %1617 = vmatprep.subr.mxu0 0.0
        %1618 = vmatpush2.msra.mxu0 0.0
        %1619 = vmatprep.subr.mxu0 0.0
        %1620 = vmatpush2.msra.mxu0 0.0
        %1621 = vmatprep.subr.mxu0 0.0
        %1622 = vmatpush2.msra.mxu0 0.0
        %1623 = vmatprep.subr.mxu0 0.0
        %1624 = vmatpush2.msra.mxu0 0.0
        %1625 = vmatprep.subr.mxu0 0.0
        %1626 = vmatpush2.msra.mxu0 0.0
        %1627 = vmatprep.subr.mxu0 0.0
        %1628 = vmatpush2.msra.mxu0 0.0
        %1629 = vmatprep.subr.mxu0 0.0
        %1630 = vmatpush2.msra.mxu0 0.0
        %1631 = vmatprep.subr.mxu0 0.0
        %1632 = vmatpush2.msra.mxu0 0.0
        %1633 = vmatprep.subr.mxu0 0.0
        %1634 = vmatpush2.msra.mxu0 0.0
        %1635 = vmatprep.subr.mxu0 0.0
        %1636 = vmatpush2.msra.mxu0 0.0
        %1637 = vmatprep.subr.mxu0 0.0
        %1638 = vmatpush2.msra.mxu0 0.0
        %1639 = vmatprep.subr.mxu0 0.0
        %1640 = vmatpush2.msra.mxu0 0.0
        %1641 = vmatprep.subr.mxu0 0.0
        %1642 = vmatpush2.msra.mxu0 0.0
        %1643 = vmatprep.subr.mxu0 0.0
        %1644 = vmatpush2.msra.mxu0 0.0
        %1645 = vmatprep.subr.mxu0 0.0
        %1646 = vmatpush2.msra.mxu0 0.0
        %1647 = vmatprep.mubr.f32.mxu0 0.0
        %1648 = vmatmul.mubr.f32.gmra.mxu0 %v1581
        %v1649 = vpop.f32.mrf.mxu0
        %v1650 = vadd.f32 0.0, %v1649
        %v1651 = vpop.f32.mrf.mxu0
        %1652 = vdwg.mxu0
        %v1653 = vrcp.pop %v1576
        %v1654 = vmul.f32 %v1650, %v1653
        %1656 = vrot.lane.b32.xlu0 %v1654, 24
        %v1657 = vpop.permute.xlu0 %1656
        %vm1659 = vcmask 228544
        %1660 = vst.msk [vmem:[#allocation4] sm:$0xff] %vm1659, %v1657
        %1661 = vrot.lane.b32.xlu0 %v468, 100
        %v1662 = vpop.permute.xlu0 %1661
        %1663 = vrot.lane.b32.xlu0 %v469, 100
        %v1664 = vpop.permute.xlu0 %1663
        %v1665 = vsel %vm471, %v1662, 0
        %v1667 = vsel %vm471, %v1664, 0
        %1669 = vmatprep.subr.mxu0 0.0
        %1670 = vmatpush1.xpose.msra.mxu0 0.0
        %1671 = vmatprep.subr.mxu0 0.0
        %1672 = vmatpush1.xpose.msra.mxu0 0.0
        %1673 = vmatprep.subr.mxu0 0.0
        %1674 = vmatpush1.xpose.msra.mxu0 0.0
        %1675 = vmatprep.subr.mxu0 0.0
        %1676 = vmatpush1.xpose.msra.mxu0 0.0
        %1677 = vmatprep.subr.mxu0 0.0
        %1678 = vmatpush1.xpose.msra.mxu0 0.0
        %1679 = vmatprep.subr.mxu0 0.0
        %1680 = vmatpush1.xpose.msra.mxu0 0.0
        %1681 = vmatprep.subr.mxu0 0.0
        %1682 = vmatpush1.xpose.msra.mxu0 0.0
        %1683 = vmatprep.subr.mxu0 0.0
        %1684 = vmatpush1.xpose.msra.mxu0 0.0
        %1685 = vmatprep.subr.mxu0 0.0
        %1686 = vmatpush1.xpose.msra.mxu0 0.0
        %1687 = vmatprep.subr.mxu0 0.0
        %1688 = vmatpush1.xpose.msra.mxu0 0.0
        %1689 = vmatprep.subr.mxu0 0.0
        %1690 = vmatpush1.xpose.msra.mxu0 0.0
        %1691 = vmatprep.subr.mxu0 0.0
        %1692 = vmatpush1.xpose.msra.mxu0 0.0
        %1693 = vmatprep.subr.mxu0 0.0
        %1694 = vmatpush1.xpose.msra.mxu0 0.0
        %1695 = vmatprep.subr.mxu0 0.0
        %1696 = vmatpush1.xpose.msra.mxu0 0.0
        %1697 = vmatprep.subr.mxu0 0.0
        %1698 = vmatpush1.xpose.msra.mxu0 0.0
        %1699 = vmatprep.subr.mxu0 0.0
        %1700 = vmatpush1.xpose.msra.mxu0 %v1667
        %1701 = vmatprep.subr.mxu0 0.0
        %1702 = vmatpush2.xpose.msra.mxu0 0.0
        %1703 = vmatprep.subr.mxu0 0.0
        %1704 = vmatpush2.xpose.msra.mxu0 0.0
        %1705 = vmatprep.subr.mxu0 0.0
        %1706 = vmatpush2.xpose.msra.mxu0 0.0
        %1707 = vmatprep.subr.mxu0 0.0
        %1708 = vmatpush2.xpose.msra.mxu0 0.0
        %1709 = vmatprep.subr.mxu0 0.0
        %1710 = vmatpush2.xpose.msra.mxu0 0.0
        %1711 = vmatprep.subr.mxu0 0.0
        %1712 = vmatpush2.xpose.msra.mxu0 0.0
        %1713 = vmatprep.subr.mxu0 0.0
        %1714 = vmatpush2.xpose.msra.mxu0 0.0
        %1715 = vmatprep.subr.mxu0 0.0
        %1716 = vmatpush2.xpose.msra.mxu0 0.0
        %1717 = vmatprep.subr.mxu0 0.0
        %1718 = vmatpush2.xpose.msra.mxu0 0.0
        %1719 = vmatprep.subr.mxu0 0.0
        %1720 = vmatpush2.xpose.msra.mxu0 0.0
        %1721 = vmatprep.subr.mxu0 0.0
        %1722 = vmatpush2.xpose.msra.mxu0 0.0
        %1723 = vmatprep.subr.mxu0 0.0
        %1724 = vmatpush2.xpose.msra.mxu0 0.0
        %1725 = vmatprep.subr.mxu0 0.0
        %1726 = vmatpush2.xpose.msra.mxu0 0.0
        %1727 = vmatprep.subr.mxu0 0.0
        %1728 = vmatpush2.xpose.msra.mxu0 0.0
        %1729 = vmatprep.subr.mxu0 0.0
        %1730 = vmatpush2.xpose.msra.mxu0 0.0
        %1731 = vmatprep.subr.mxu0 0.0
        %1732 = vmatpush2.xpose.msra.mxu0 0.0
        %1733 = vmatprep.mubr.f32.mxu0 0.0
        %1734 = vmatmul.mubr.f32.gmra.mxu0 %v1665
        %v1735 = vpop.f32.mrf.mxu0
        %v1736 = vadd.f32 0.0, %v1735
        %v1737 = vpop.f32.mrf.mxu0
        %1738 = vdwg.mxu0
        %v1739 = vsel %vm548, %v1736, -inf
        %1740 = vmax.xlane.f32.xlu0 %v1739
        %v1741 = vpop.xlane.xlu0 %1740
        %v1742 = vsub.f32 %v1736, %v1741
        %v1743 = vmul.f32 %v1742, 1.442695
        %v1744 = vpow.pop %v1743
        %v1745 = vsel %vm548, %v1744, 0.0
        %1746 = vadd.xlane.f32.xlu0 %v1745
        %v1747 = vpop.xlane.xlu0 %1746
        %1748 = vrot.lane.b32.xlu0 %v470, 100
        %v1749 = vpop.permute.xlu0 %1748
        %v1752 = vsel %vm548, %v1744, 0
        %1754 = vmatprep.subr.mxu0 0.0
        %1755 = vmatpush1.msra.mxu0 0.0
        %1756 = vmatprep.subr.mxu0 0.0
        %1757 = vmatpush1.msra.mxu0 0.0
        %1758 = vmatprep.subr.mxu0 0.0
        %1759 = vmatpush1.msra.mxu0 0.0
        %1760 = vmatprep.subr.mxu0 0.0
        %1761 = vmatpush1.msra.mxu0 0.0
        %1762 = vmatprep.subr.mxu0 0.0
        %1763 = vmatpush1.msra.mxu0 0.0
        %1764 = vmatprep.subr.mxu0 0.0
        %1765 = vmatpush1.msra.mxu0 0.0
        %1766 = vmatprep.subr.mxu0 0.0
        %1767 = vmatpush1.msra.mxu0 0.0
        %1768 = vmatprep.subr.mxu0 0.0
        %1769 = vmatpush1.msra.mxu0 0.0
        %1770 = vmatprep.subr.mxu0 0.0
        %1771 = vmatpush1.msra.mxu0 0.0
        %1772 = vmatprep.subr.mxu0 0.0
        %1773 = vmatpush1.msra.mxu0 0.0
        %1774 = vmatprep.subr.mxu0 0.0
        %1775 = vmatpush1.msra.mxu0 0.0
        %1776 = vmatprep.subr.mxu0 0.0
        %1777 = vmatpush1.msra.mxu0 0.0
        %1778 = vmatprep.subr.mxu0 0.0
        %1779 = vmatpush1.msra.mxu0 0.0
        %1780 = vmatprep.subr.mxu0 0.0
        %1781 = vmatpush1.msra.mxu0 0.0
        %1782 = vmatprep.subr.mxu0 0.0
        %1783 = vmatpush1.msra.mxu0 0.0
        %1784 = vmatprep.subr.mxu0 0.0
        %1785 = vmatpush1.msra.mxu0 %v1749
        %1786 = vmatprep.subr.mxu0 0.0
        %1787 = vmatpush2.msra.mxu0 0.0
        %1788 = vmatprep.subr.mxu0 0.0
        %1789 = vmatpush2.msra.mxu0 0.0
        %1790 = vmatprep.subr.mxu0 0.0
        %1791 = vmatpush2.msra.mxu0 0.0
        %1792 = vmatprep.subr.mxu0 0.0
        %1793 = vmatpush2.msra.mxu0 0.0
        %1794 = vmatprep.subr.mxu0 0.0
        %1795 = vmatpush2.msra.mxu0 0.0
        %1796 = vmatprep.subr.mxu0 0.0
        %1797 = vmatpush2.msra.mxu0 0.0
        %1798 = vmatprep.subr.mxu0 0.0
        %1799 = vmatpush2.msra.mxu0 0.0
        %1800 = vmatprep.subr.mxu0 0.0
        %1801 = vmatpush2.msra.mxu0 0.0
        %1802 = vmatprep.subr.mxu0 0.0
        %1803 = vmatpush2.msra.mxu0 0.0
        %1804 = vmatprep.subr.mxu0 0.0
        %1805 = vmatpush2.msra.mxu0 0.0
        %1806 = vmatprep.subr.mxu0 0.0
        %1807 = vmatpush2.msra.mxu0 0.0
        %1808 = vmatprep.subr.mxu0 0.0
        %1809 = vmatpush2.msra.mxu0 0.0
        %1810 = vmatprep.subr.mxu0 0.0
        %1811 = vmatpush2.msra.mxu0 0.0
        %1812 = vmatprep.subr.mxu0 0.0
        %1813 = vmatpush2.msra.mxu0 0.0
        %1814 = vmatprep.subr.mxu0 0.0
        %1815 = vmatpush2.msra.mxu0 0.0
        %1816 = vmatprep.subr.mxu0 0.0
        %1817 = vmatpush2.msra.mxu0 0.0
        %1818 = vmatprep.mubr.f32.mxu0 0.0
        %1819 = vmatmul.mubr.f32.gmra.mxu0 %v1752
        %v1820 = vpop.f32.mrf.mxu0
        %v1821 = vadd.f32 0.0, %v1820
        %v1822 = vpop.f32.mrf.mxu0
        %1823 = vdwg.mxu0
        %v1824 = vrcp.pop %v1747
        %v1825 = vmul.f32 %v1821, %v1824
        %1827 = vrot.lane.b32.xlu0 %v1825, 28
        %v1828 = vpop.permute.xlu0 %1827
        %vm1830 = vcmask 261344
        %1831 = vst.msk [vmem:[#allocation4] sm:$0xff] %vm1830, %v1828
        %v1832 = vld [vmem:[#allocation4] sm:$0xff]
        %v1833 = vld [vmem:[#allocation11] sm:$0xff]
        %v1834 = vld [vmem:[#allocation11 + $0x8] sm:$0xff]
        %v1835 = vld [vmem:[#allocation11 + $0x10] sm:$0xff]
        %v1836 = vld [vmem:[#allocation11 + $0x18] sm:$0xff]
        %v1837 = vld [vmem:[%s4] sm:$0x1]
        %v1839 = vlaneseq
        %v1840 = vshrl.u32 %v1839, 7
        %v1841 = vsub.s32 0, %v1840
        %v1842 = vrot.slane %v1837, %v1841
        %v1845 = vsel %vm394, %v1832, 0
        %1847 = vmatprep.subr.mxu0 0.0
        %1848 = vmatpush1.msra.mxu0 0.0
        %1849 = vmatprep.subr.mxu0 0.0
        %1850 = vmatpush1.msra.mxu0 0.0
        %1851 = vmatprep.subr.mxu0 0.0
        %1852 = vmatpush1.msra.mxu0 0.0
        %1853 = vmatprep.subr.mxu0 0.0
        %1854 = vmatpush1.msra.mxu0 0.0
        %1855 = vmatprep.subr.mxu0 0.0
        %1856 = vmatpush1.msra.mxu0 0.0
        %1857 = vmatprep.subr.mxu0 0.0
        %1858 = vmatpush1.msra.mxu0 0.0
        %1859 = vmatprep.subr.mxu0 0.0
        %1860 = vmatpush1.msra.mxu0 0.0
        %1861 = vmatprep.subr.mxu0 0.0
        %1862 = vmatpush1.msra.mxu0 0.0
        %1863 = vmatprep.subr.mxu0 0.0
        %1864 = vmatpush1.msra.mxu0 0.0
        %1865 = vmatprep.subr.mxu0 0.0
        %1866 = vmatpush1.msra.mxu0 0.0
        %1867 = vmatprep.subr.mxu0 0.0
        %1868 = vmatpush1.msra.mxu0 0.0
        %1869 = vmatprep.subr.mxu0 0.0
        %1870 = vmatpush1.msra.mxu0 0.0
        %1871 = vmatprep.subr.mxu0 0.0
        %1872 = vmatpush1.msra.mxu0 %v1836
        %1873 = vmatprep.subr.mxu0 0.0
        %1874 = vmatpush1.msra.mxu0 %v1835
        %1875 = vmatprep.subr.mxu0 0.0
        %1876 = vmatpush1.msra.mxu0 %v1834
        %1877 = vmatprep.subr.mxu0 0.0
        %1878 = vmatpush1.msra.mxu0 %v1833
        %1879 = vmatprep.subr.mxu0 0.0
        %1880 = vmatpush2.msra.mxu0 0.0
        %1881 = vmatprep.subr.mxu0 0.0
        %1882 = vmatpush2.msra.mxu0 0.0
        %1883 = vmatprep.subr.mxu0 0.0
        %1884 = vmatpush2.msra.mxu0 0.0
        %1885 = vmatprep.subr.mxu0 0.0
        %1886 = vmatpush2.msra.mxu0 0.0
        %1887 = vmatprep.subr.mxu0 0.0
        %1888 = vmatpush2.msra.mxu0 0.0
        %1889 = vmatprep.subr.mxu0 0.0
        %1890 = vmatpush2.msra.mxu0 0.0
        %1891 = vmatprep.subr.mxu0 0.0
        %1892 = vmatpush2.msra.mxu0 0.0
        %1893 = vmatprep.subr.mxu0 0.0
        %1894 = vmatpush2.msra.mxu0 0.0
        %1895 = vmatprep.subr.mxu0 0.0
        %1896 = vmatpush2.msra.mxu0 0.0
        %1897 = vmatprep.subr.mxu0 0.0
        %1898 = vmatpush2.msra.mxu0 0.0
        %1899 = vmatprep.subr.mxu0 0.0
        %1900 = vmatpush2.msra.mxu0 0.0
        %1901 = vmatprep.subr.mxu0 0.0
        %1902 = vmatpush2.msra.mxu0 0.0
        %1903 = vmatprep.subr.mxu0 0.0
        %1904 = vmatpush2.msra.mxu0 0.0
        %1905 = vmatprep.subr.mxu0 0.0
        %1906 = vmatpush2.msra.mxu0 0.0
        %1907 = vmatprep.subr.mxu0 0.0
        %1908 = vmatpush2.msra.mxu0 0.0
        %1909 = vmatprep.subr.mxu0 0.0
        %1910 = vmatpush2.msra.mxu0 0.0
        %1911 = vmatprep.mubr.f32.mxu0 0.0
        %1912 = vmatmul.mubr.f32.gmra.mxu0 %v1845
        %v1913 = vpop.f32.mrf.mxu0
        %v1914 = vadd.f32 %v1842, %v1913
        %v1915 = vpop.f32.mrf.mxu0
        %1916 = vdwg.mxu0
        %1917 = vst.msk [vmem:[%s297] sm:$0xff] %vm394, %v1914
        %s1918 = sand.u32 %s156, 1
        %s1919 = scalar_lea.sflag [#allocation7], %s1918
        %s1920 = sand.u32 %s156, 1
        %s1921 = smul.addr %s1920, 8
        %s1922 = scalar_lea.vmem [#allocation13], %s1921
        // Predicated region
        $region61: #{tpu_custom_call.1} parent=39 // pred_check
          %p1923 = pneg %p166
        $region62: #{tpu_custom_call.1} parent=39 // pred_check_branch
          %1925 = sbr.rel (%p1923) target = $region64
        $region63: #{tpu_custom_call.1} parent=39 // pred_region
          %s1927 = ssub.s32 128, 128
          %1928 = vsyncadd %s1919, %s1927
          %s1929 = sadd.s32 %s29, %s28
          %s1930 = smul.addr %s1929, 128
          %s1931 = scalar_lea.hbm %s5, %s1930
          %s1933 = sshll.u32 %s1922, 4
          %s1934 = int_to_ptr.vmem [resolvable:$true] %s1933
          %1936 = dma.vmem_to_hbm [thread:$0]  %s1934, 128, %s1931, %s1919
        $region64: #{tpu_custom_call.1} parent=39 // pred_fallthru
          _
      $region40: #{tpu_custom_call.1} parent=5 // pred_fallthru
        _
      %p1937 = scmp.le.s32.totalorder 2, %s19
      // Predicated region
      $region65: #{tpu_custom_call.1} parent=5 // pred_check
        %p1938 = pneg %p1937
      $region66: #{tpu_custom_call.1} parent=5 // pred_check_branch
        %1940 = sbr.rel (%p1938) target = $region68
      $region67: #{tpu_custom_call.1} parent=5 // pred_region
        %s1941 = ssub.s32 %s19, 2
        // Predicated region
        $region69: #{tpu_custom_call.1} parent=67 // pred_check
          %p1942 = pneg %p172
        $region70: #{tpu_custom_call.1} parent=67 // pred_check_branch
          %1944 = sbr.rel (%p1942) target = $region72
        $region71: #{tpu_custom_call.1} parent=67 // pred_region
          %s1945 = sand.u32 %s157, 1
          %s1946 = scalar_lea.sflag [#allocation7], %s1945
          %s1947 = sand.u32 %s157, 1
          %s1948 = smul.addr %s1947, 8
          %s1949 = scalar_lea.vmem [#allocation13], %s1948
          %1950 = dma.done %s1946, 128
        $region72: #{tpu_custom_call.1} parent=67 // pred_fallthru
          _
      $region68: #{tpu_custom_call.1} parent=5 // pred_fallthru
        _
    $region6: #{tpu_custom_call.1} parent=1 // loop_footer
      %s23 = sadd.s32 1, %s19
    $region7: #{tpu_custom_call.1} parent=1 // loop_footer_branch
      %18 = sbr.rel target = $region3
    $region8: #{tpu_custom_call.1} parent=1 // loop_exit
      _
    %1951 = vsyncpa [#allocation6], 1
    %s1952 = scalar_lea.sflag [#allocation6], 1
    %1953 = vsyncpa %s1952, 1
    %1954 = vsyncpa [#allocation9], 1
    %1955 = vsyncpa [#allocation12], 1
    %1956 = vsyncpa [#allocation7], 1
    %s1957 = scalar_lea.sflag [#allocation7], 1
    %1958 = vsyncpa %s1957, 1

</llo_original>
